<compile_context>
chip_gen: v7x
topology: tpu7x:2x2x1
jax: 0.10.0
libtpu: 0.0.40
codegen_flags: <defaults>
</compile_context>

<pallas_src>
import functools
import math

import numpy as np
import jax
import jax.numpy as jnp
from jax.experimental import pallas as pl
from jax.experimental.pallas import tpu as pltpu


# ----------------------------------------------------------------------------
# Fused VarAttBlock kernel: one grid step per batch element.
# ----------------------------------------------------------------------------
def _var_att_block_kernel(x_ref, mask_ref, gamma_ref, beta_ref,
                          wq_ref, wk_ref, wv_ref, wo_ref, bo_ref, hd_ref,
                          o_ref, *, eps, scale):
    n, p_, c = x_ref.shape
    x = x_ref[...]                                            # (N, P, C) f32

    # ---- LayerNorm (f32 statistics; VPU/EUP) --------------------------------
    mu = jnp.mean(x, axis=-1, keepdims=True)
    xc = x - mu
    var = jnp.mean(xc * xc, axis=-1, keepdims=True)
    xn = xc * jax.lax.rsqrt(var + eps) * gamma_ref[...] + beta_ref[...]

    xn2 = xn.reshape(n * p_, c)                               # rows x C (lane-dense)

    # ---- projections (MXU, f32 accumulate); q only needs patch-0 rows -------
    # TODO(synk): for large C cast dot operands to bf16 (keep f32 accumulate)
    # to halve weight/activation bytes; kept f32 here for exact small-shape test.
    q0 = jnp.dot(xn[:, 0, :], wq_ref[...],
                 preferred_element_type=jnp.float32)          # (N, C)
    k2 = jnp.dot(xn2, wk_ref[...], preferred_element_type=jnp.float32)  # (N*P, C)
    v2 = jnp.dot(xn2, wv_ref[...], preferred_element_type=jnp.float32)  # (N*P, C)
    k3 = k2.reshape(n, p_, c)
    v3 = v2.reshape(n, p_, c)

    # ---- masked mean-pool of K over patches, BEFORE the head split ----------
    m = mask_ref[...]                                         # (N, P) 0/1 f32
    keep = (m != 0.0).astype(jnp.float32)[:, :, None]         # masked_fill(~mask, 0)
    denom = jnp.sum(m, axis=-1, keepdims=True)                # (N, 1); assumed > 0
    kmean = jnp.sum(k3 * keep, axis=1) * pl.reciprocal(denom, approx=True)  # (N, C)

    # ---- per-head scores, kept channel-wise (lane-dense) --------------------
    # s[nq, nk, ch] = scale * sum_{ch' in head(ch)} q0[nq, ch'] * kmean[nk, ch']
    prod = (q0[:, None, :] * kmean[None, :, :]).reshape(n * n, c)
    s = (jnp.dot(prod, hd_ref[...], preferred_element_type=jnp.float32)
         * scale).reshape(n, n, c)

    # ---- softmax over keys (axis 1); identical across the Dh lanes of a head
    s = s - jnp.max(s, axis=1, keepdims=True)
    e = jnp.exp(s)
    w = e * pl.reciprocal(jnp.sum(e, axis=1, keepdims=True), approx=True)   # (N, N, C)

    # ---- attention output: out[nq, p, ch] = sum_nk w[nq, nk, ch] * v[nk, p, ch]
    # (small (N, N, P, C) intermediate at these sizes; tile over keys if large)
    attn = jnp.sum(w[:, :, None, :] * v3[None, :, :, :], axis=1)            # (N, P, C)

    # ---- output projection + bias + residual --------------------------------
    y2 = jnp.dot(attn.reshape(n * p_, c), wo_ref[...],
                 preferred_element_type=jnp.float32) + bo_ref[...]
    o_ref[...] = x + y2.reshape(n, p_, c)


# ----------------------------------------------------------------------------
# Wrapper: single pallas_call, weights resident, grid over batch (parallel).
# ----------------------------------------------------------------------------
def var_att_block_forward(x, mask, lens, lens_mask, params):
    """x: (B, N, P, C) f32; mask: (B, N, P) 0/1.  Returns (B, N, P, C)."""
    del lens, lens_mask                      # unused by the reference forward too
    B, N, P, C = x.shape
    H = params["num_heads"]
    Dh = C // H
    scale = 1.0 / math.sqrt(Dh)

    w_qkv = params["w_qkv"]                  # (C, 3C); qkv_bias=False -> no bias
    w_q, w_k, w_v = w_qkv[:, :C], w_qkv[:, C:2 * C], w_qkv[:, 2 * C:]

    # Constant block-diagonal "same head" matrix: hd[c, c'] = 1 iff head(c)==head(c').
    hid = np.arange(C) // Dh
    hd = jnp.asarray((hid[:, None] == hid[None, :]).astype(np.float32))

    kernel = functools.partial(_var_att_block_kernel, eps=1e-5, scale=scale)
    return pl.pallas_call(
        kernel,
        out_shape=jax.ShapeDtypeStruct((B, N, P, C), jnp.float32),
        grid_spec=pltpu.PrefetchScalarGridSpec(
            num_scalar_prefetch=0,
            grid=(B,),                       # one batch element per grid step
            in_specs=[
                pl.BlockSpec((None, N, P, C), lambda b: (b, 0, 0, 0)),   # x
                pl.BlockSpec((None, N, P), lambda b: (b, 0, 0)),         # mask
                pl.BlockSpec((1, C), lambda b: (0, 0)),                  # ln gamma (resident)
                pl.BlockSpec((1, C), lambda b: (0, 0)),                  # ln beta  (resident)
                pl.BlockSpec((C, C), lambda b: (0, 0)),                  # w_q      (resident)
                pl.BlockSpec((C, C), lambda b: (0, 0)),                  # w_k      (resident)
                pl.BlockSpec((C, C), lambda b: (0, 0)),                  # w_v      (resident)
                pl.BlockSpec((C, C), lambda b: (0, 0)),                  # w_proj   (resident)
                pl.BlockSpec((1, C), lambda b: (0, 0)),                  # b_proj   (resident)
                pl.BlockSpec((C, C), lambda b: (0, 0)),                  # head matrix (resident)
            ],
            out_specs=pl.BlockSpec((None, N, P, C), lambda b: (b, 0, 0, 0)),
        ),
        compiler_params=pltpu.CompilerParams(
            dimension_semantics=("parallel",),      # batches shard across TCs (megacore/v7x)
            vmem_limit_bytes=32 * 1024 * 1024,      # explicit, safe on v5e/v6e/v7x
        ),
    )(x, mask.astype(jnp.float32), params["ln_gamma"], params["ln_beta"],
      w_q, w_k, w_v, params["w_proj"], params["b_proj"], hd)


# ----------------------------------------------------------------------------
# Pure-JAX reference (mirrors the PyTorch code path exactly)
# ----------------------------------------------------------------------------
def _reference_forward(x, mask, params):
    B, N, P, C = x.shape
    H = params["num_heads"]
    Dh = C // H
    g = params["ln_gamma"].reshape(C)
    bta = params["ln_beta"].reshape(C)
    wqkv = params["w_qkv"]
    wproj, bproj = params["w_proj"], params["b_proj"].reshape(-1)

    mu = jnp.mean(x, axis=-1, keepdims=True)
    var = jnp.mean((x - mu) ** 2, axis=-1, keepdims=True)
    xn = (x - mu) / jnp.sqrt(var + 1e-5) * g + bta

    qkv = jnp.einsum('bnpc,cd->bnpd', xn, wqkv, precision='highest')
    qkv = jnp.transpose(qkv.reshape(B, N, P, 3, H, Dh), (3, 0, 2, 4, 1, 5))
    q, k, v = qkv[0], qkv[1], qkv[2]                            # (B, P, H, N, Dh)
    q = q[:, 0]                                                 # (B, H, N, Dh)
    mperm = jnp.transpose(
        jnp.broadcast_to(mask.reshape(B, N, P, 1, 1), (B, N, P, H, Dh)),
        (0, 2, 3, 1, 4))                                        # (B, P, H, N, Dh)
    k = jnp.where(mperm != 0, k, 0.0).sum(axis=1) / mperm.sum(axis=1)
    v = jnp.transpose(v, (0, 2, 3, 4, 1)).reshape(B, H, N, Dh * P)

    s = jnp.einsum('bhnd,bhmd->bhnm', q, k, precision='highest') / math.sqrt(Dh)
    a = jax.nn.softmax(s, axis=-1)
    o = jnp.einsum('bhnm,bhmx->bhnx', a, v, precision='highest')
    o = jnp.transpose(o.reshape(B, H, N, Dh, P), (0, 2, 4, 1, 3)).reshape(B, N, P, C)
    o = jnp.einsum('bnpc,cd->bnpd', o, wproj, precision='highest') + bproj
    return x + o


if __name__ == "__main__":
    B, N, P, C, H = 2, 8, 4, 32, 4   # batch, n_vars, patches, dim, heads

    key = jax.random.PRNGKey(0)
    kx, km, kg, kb, kw1, kw2, kb2 = jax.random.split(key, 7)

    x = jax.random.normal(kx, (B, N, P, C), dtype=jnp.float32)
    mask = (jax.random.uniform(km, (B, N, P)) > 0.3).astype(jnp.float32)
    mask = mask.at[:, :, 0].set(1.0)                     # >=1 valid patch per (b, n)
    lens = jnp.full((B, N), P, dtype=jnp.int32)          # unused by forward
    lens_mask = jnp.ones((B, N), dtype=jnp.float32)      # unused by forward

    params = {
        "num_heads": H,
        "ln_gamma": (1.0 + 0.1 * jax.random.normal(kg, (1, C))).astype(jnp.float32),
        "ln_beta": (0.1 * jax.random.normal(kb, (1, C))).astype(jnp.float32),
        "w_qkv": (0.08 * jax.random.normal(kw1, (C, 3 * C))).astype(jnp.float32),
        "w_proj": (0.08 * jax.random.normal(kw2, (C, C))).astype(jnp.float32),
        "b_proj": (0.05 * jax.random.normal(kb2, (1, C))).astype(jnp.float32),
    }

    out = var_att_block_forward(x, mask, lens, lens_mask, params)
    out = jax.block_until_ready(out)

    ref = _reference_forward(x, mask, params)
    np.testing.assert_allclose(np.asarray(out), np.asarray(ref), rtol=1e-2, atol=1e-2)

    print("KERNEL_OK")
</pallas_src>

<mosaic_0001>
module attributes {stable_mosaic.version = 11 : i64} {
  func.func @_var_att_block_kernel(%arg0: i32, %arg1: memref<1x8x4x32xf32, #tpu.memory_space<vmem>>, %arg2: memref<1x8x4xf32, #tpu.memory_space<vmem>>, %arg3: memref<1x32xf32, #tpu.memory_space<vmem>>, %arg4: memref<1x32xf32, #tpu.memory_space<vmem>>, %arg5: memref<32x32xf32, #tpu.memory_space<vmem>>, %arg6: memref<32x32xf32, #tpu.memory_space<vmem>>, %arg7: memref<32x32xf32, #tpu.memory_space<vmem>>, %arg8: memref<32x32xf32, #tpu.memory_space<vmem>>, %arg9: memref<1x32xf32, #tpu.memory_space<vmem>>, %arg10: memref<32x32xf32, #tpu.memory_space<vmem>>, %arg11: memref<1x8x4x32xf32, #tpu.memory_space<vmem>>) attributes {dimension_semantics = [#tpu.dimension_semantics<parallel>], iteration_bounds = array<i64: 2>, scalar_prefetch = 0 : i64, scratch_operands = 0 : i64, tpu.core_type = #tpu.core_type<tc>, window_params = [{transform_indices = @transform_0, window_bounds = array<i64: 1, 8, 4, 32>}, {transform_indices = @transform_1, window_bounds = array<i64: 1, 8, 4>}, {pipeline_mode = #tpu.pipeline_mode<synchronous>, transform_indices = @transform_2, window_bounds = array<i64: 1, 32>}, {pipeline_mode = #tpu.pipeline_mode<synchronous>, transform_indices = @transform_3, window_bounds = array<i64: 1, 32>}, {pipeline_mode = #tpu.pipeline_mode<synchronous>, transform_indices = @transform_4, window_bounds = array<i64: 32, 32>}, {pipeline_mode = #tpu.pipeline_mode<synchronous>, transform_indices = @transform_5, window_bounds = array<i64: 32, 32>}, {pipeline_mode = #tpu.pipeline_mode<synchronous>, transform_indices = @transform_6, window_bounds = array<i64: 32, 32>}, {pipeline_mode = #tpu.pipeline_mode<synchronous>, transform_indices = @transform_7, window_bounds = array<i64: 32, 32>}, {pipeline_mode = #tpu.pipeline_mode<synchronous>, transform_indices = @transform_8, window_bounds = array<i64: 1, 32>}, {pipeline_mode = #tpu.pipeline_mode<synchronous>, transform_indices = @transform_9, window_bounds = array<i64: 32, 32>}, {transform_indices = @transform_10, window_bounds = array<i64: 1, 8, 4, 32>}]} {
    %c0 = arith.constant 0 : index
    %c0_0 = arith.constant 0 : index
    %c0_1 = arith.constant 0 : index
    %c0_2 = arith.constant 0 : index
    %0 = vector.load %arg1[%c0, %c0_0, %c0_1, %c0_2] : memref<1x8x4x32xf32, #tpu.memory_space<vmem>>, vector<1x8x4x32xf32>
    %1 = vector.shape_cast %0 : vector<1x8x4x32xf32> to vector<8x4x32xf32>
    %cst = arith.constant dense<0.000000e+00> : vector<8x4xf32>
    %2 = vector.multi_reduction <add>, %1, %cst [2] : vector<8x4x32xf32> to vector<8x4xf32>
    %3 = vector.shape_cast %2 : vector<8x4xf32> to vector<8x4x1xf32>
    %cst_3 = arith.constant 3.200000e+01 : f32
    %4 = vector.broadcast %cst_3 : f32 to vector<8x4x1xf32>
    %5 = arith.divf %3, %4 : vector<8x4x1xf32>
    %6 = vector.broadcast %5 : vector<8x4x1xf32> to vector<8x4x32xf32>
    %7 = arith.subf %1, %6 : vector<8x4x32xf32>
    %8 = arith.mulf %7, %7 : vector<8x4x32xf32>
    %cst_4 = arith.constant dense<0.000000e+00> : vector<8x4xf32>
    %9 = vector.multi_reduction <add>, %8, %cst_4 [2] : vector<8x4x32xf32> to vector<8x4xf32>
    %10 = vector.shape_cast %9 : vector<8x4xf32> to vector<8x4x1xf32>
    %cst_5 = arith.constant 3.200000e+01 : f32
    %11 = vector.broadcast %cst_5 : f32 to vector<8x4x1xf32>
    %12 = arith.divf %10, %11 : vector<8x4x1xf32>
    %cst_6 = arith.constant 9.99999974E-6 : f32
    %13 = vector.broadcast %cst_6 : f32 to vector<8x4x1xf32>
    %14 = arith.addf %12, %13 : vector<8x4x1xf32>
    %15 = math.rsqrt %14 : vector<8x4x1xf32>
    %16 = vector.broadcast %15 : vector<8x4x1xf32> to vector<8x4x32xf32>
    %17 = arith.mulf %7, %16 : vector<8x4x32xf32>
    %c0_7 = arith.constant 0 : index
    %c0_8 = arith.constant 0 : index
    %18 = vector.load %arg3[%c0_7, %c0_8] : memref<1x32xf32, #tpu.memory_space<vmem>>, vector<1x32xf32>
    %19 = vector.shape_cast %18 : vector<1x32xf32> to vector<1x1x32xf32>
    %20 = vector.broadcast %19 : vector<1x1x32xf32> to vector<8x4x32xf32>
    %21 = arith.mulf %17, %20 : vector<8x4x32xf32>
    %c0_9 = arith.constant 0 : index
    %c0_10 = arith.constant 0 : index
    %22 = vector.load %arg4[%c0_9, %c0_10] : memref<1x32xf32, #tpu.memory_space<vmem>>, vector<1x32xf32>
    %23 = vector.shape_cast %22 : vector<1x32xf32> to vector<1x1x32xf32>
    %24 = vector.broadcast %23 : vector<1x1x32xf32> to vector<8x4x32xf32>
    %25 = arith.addf %21, %24 : vector<8x4x32xf32>
    %26 = vector.shape_cast %25 : vector<8x4x32xf32> to vector<32x32xf32>
    %27 = vector.extract_strided_slice %25 {offsets = [0, 0, 0], sizes = [8, 1, 32], strides = [1, 1, 1]} : vector<8x4x32xf32> to vector<8x1x32xf32>
    %28 = vector.shape_cast %27 : vector<8x1x32xf32> to vector<8x32xf32>
    %c0_11 = arith.constant 0 : index
    %c0_12 = arith.constant 0 : index
    %29 = vector.load %arg5[%c0_11, %c0_12] : memref<32x32xf32, #tpu.memory_space<vmem>>, vector<32x32xf32>
    %cst_13 = arith.constant dense<0.000000e+00> : vector<8x32xf32>
    %30 = tpu.matmul %28, %29, %cst_13 {dimension_numbers = #tpu.dot_dimension_numbers<[1], [0], [0], [1], [0, 0, 1, 1], [], []>} : vector<8x32xf32>, vector<32x32xf32>, vector<8x32xf32> -> vector<8x32xf32>
    %c0_14 = arith.constant 0 : index
    %c0_15 = arith.constant 0 : index
    %31 = vector.load %arg6[%c0_14, %c0_15] : memref<32x32xf32, #tpu.memory_space<vmem>>, vector<32x32xf32>
    %cst_16 = arith.constant dense<0.000000e+00> : vector<32x32xf32>
    %32 = tpu.matmul %26, %31, %cst_16 {dimension_numbers = #tpu.dot_dimension_numbers<[1], [0], [0], [1], [0, 0, 1, 1], [], []>} : vector<32x32xf32>, vector<32x32xf32>, vector<32x32xf32> -> vector<32x32xf32>
    %c0_17 = arith.constant 0 : index
    %c0_18 = arith.constant 0 : index
    %33 = vector.load %arg7[%c0_17, %c0_18] : memref<32x32xf32, #tpu.memory_space<vmem>>, vector<32x32xf32>
    %cst_19 = arith.constant dense<0.000000e+00> : vector<32x32xf32>
    %34 = tpu.matmul %26, %33, %cst_19 {dimension_numbers = #tpu.dot_dimension_numbers<[1], [0], [0], [1], [0, 0, 1, 1], [], []>} : vector<32x32xf32>, vector<32x32xf32>, vector<32x32xf32> -> vector<32x32xf32>
    %35 = vector.shape_cast %32 : vector<32x32xf32> to vector<8x4x32xf32>
    %36 = vector.shape_cast %34 : vector<32x32xf32> to vector<8x4x32xf32>
    %c0_20 = arith.constant 0 : index
    %c0_21 = arith.constant 0 : index
    %c0_22 = arith.constant 0 : index
    %37 = vector.load %arg2[%c0_20, %c0_21, %c0_22] : memref<1x8x4xf32, #tpu.memory_space<vmem>>, vector<1x8x4xf32>
    %38 = vector.shape_cast %37 : vector<1x8x4xf32> to vector<8x4xf32>
    %cst_23 = arith.constant 0.000000e+00 : f32
    %39 = vector.broadcast %cst_23 : f32 to vector<8x4xf32>
    %40 = arith.cmpf one, %38, %39 : vector<8x4xf32>
    %41 = arith.extui %40 : vector<8x4xi1> to vector<8x4xi32>
    %42 = arith.sitofp %41 : vector<8x4xi32> to vector<8x4xf32>
    %43 = vector.shape_cast %42 : vector<8x4xf32> to vector<8x4x1xf32>
    %cst_24 = arith.constant dense<0.000000e+00> : vector<8xf32>
    %44 = vector.multi_reduction <add>, %38, %cst_24 [1] : vector<8x4xf32> to vector<8xf32>
    %45 = vector.shape_cast %44 : vector<8xf32> to vector<8x1xf32>
    %46 = vector.broadcast %43 : vector<8x4x1xf32> to vector<8x4x32xf32>
    %47 = arith.mulf %35, %46 : vector<8x4x32xf32>
    %cst_25 = arith.constant dense<0.000000e+00> : vector<8x32xf32>
    %48 = vector.multi_reduction <add>, %47, %cst_25 [1] : vector<8x4x32xf32> to vector<8x32xf32>
    %49 = tpu.reciprocal %45 {approx = true} : vector<8x1xf32> -> vector<8x1xf32>
    %50 = vector.broadcast %49 : vector<8x1xf32> to vector<8x32xf32>
    %51 = arith.mulf %48, %50 : vector<8x32xf32>
    %52 = vector.shape_cast %30 : vector<8x32xf32> to vector<8x1x32xf32>
    %53 = vector.shape_cast %51 : vector<8x32xf32> to vector<1x8x32xf32>
    %54 = vector.broadcast %52 : vector<8x1x32xf32> to vector<8x8x32xf32>
    %55 = vector.broadcast %53 : vector<1x8x32xf32> to vector<8x8x32xf32>
    %56 = arith.mulf %54, %55 : vector<8x8x32xf32>
    %57 = vector.shape_cast %56 : vector<8x8x32xf32> to vector<64x32xf32>
    %c0_26 = arith.constant 0 : index
    %c0_27 = arith.constant 0 : index
    %58 = vector.load %arg10[%c0_26, %c0_27] : memref<32x32xf32, #tpu.memory_space<vmem>>, vector<32x32xf32>
    %cst_28 = arith.constant dense<0.000000e+00> : vector<64x32xf32>
    %59 = tpu.matmul %57, %58, %cst_28 {dimension_numbers = #tpu.dot_dimension_numbers<[1], [0], [0], [1], [0, 0, 1, 1], [], []>} : vector<64x32xf32>, vector<32x32xf32>, vector<64x32xf32> -> vector<64x32xf32>
    %cst_29 = arith.constant 0.353553385 : f32
    %60 = vector.broadcast %cst_29 : f32 to vector<64x32xf32>
    %61 = arith.mulf %59, %60 : vector<64x32xf32>
    %62 = vector.shape_cast %61 : vector<64x32xf32> to vector<8x8x32xf32>
    %cst_30 = arith.constant dense<0xFF800000> : vector<8x32xf32>
    %63 = vector.multi_reduction <maximumf>, %62, %cst_30 [1] : vector<8x8x32xf32> to vector<8x32xf32>
    %64 = vector.shape_cast %63 : vector<8x32xf32> to vector<8x1x32xf32>
    %65 = vector.broadcast %64 : vector<8x1x32xf32> to vector<8x8x32xf32>
    %66 = arith.subf %62, %65 : vector<8x8x32xf32>
    %67 = math.exp %66 : vector<8x8x32xf32>
    %cst_31 = arith.constant dense<0.000000e+00> : vector<8x32xf32>
    %68 = vector.multi_reduction <add>, %67, %cst_31 [1] : vector<8x8x32xf32> to vector<8x32xf32>
    %69 = vector.shape_cast %68 : vector<8x32xf32> to vector<8x1x32xf32>
    %70 = tpu.reciprocal %69 {approx = true} : vector<8x1x32xf32> -> vector<8x1x32xf32>
    %71 = vector.broadcast %70 : vector<8x1x32xf32> to vector<8x8x32xf32>
    %72 = arith.mulf %67, %71 : vector<8x8x32xf32>
    %73 = vector.shape_cast %72 : vector<8x8x32xf32> to vector<8x8x1x32xf32>
    %74 = vector.shape_cast %36 : vector<8x4x32xf32> to vector<1x8x4x32xf32>
    %75 = vector.broadcast %73 : vector<8x8x1x32xf32> to vector<8x8x4x32xf32>
    %76 = vector.broadcast %74 : vector<1x8x4x32xf32> to vector<8x8x4x32xf32>
    %77 = arith.mulf %75, %76 : vector<8x8x4x32xf32>
    %cst_32 = arith.constant dense<0.000000e+00> : vector<8x4x32xf32>
    %78 = vector.multi_reduction <add>, %77, %cst_32 [1] : vector<8x8x4x32xf32> to vector<8x4x32xf32>
    %79 = vector.shape_cast %78 : vector<8x4x32xf32> to vector<32x32xf32>
    %c0_33 = arith.constant 0 : index
    %c0_34 = arith.constant 0 : index
    %80 = vector.load %arg8[%c0_33, %c0_34] : memref<32x32xf32, #tpu.memory_space<vmem>>, vector<32x32xf32>
    %cst_35 = arith.constant dense<0.000000e+00> : vector<32x32xf32>
    %81 = tpu.matmul %79, %80, %cst_35 {dimension_numbers = #tpu.dot_dimension_numbers<[1], [0], [0], [1], [0, 0, 1, 1], [], []>} : vector<32x32xf32>, vector<32x32xf32>, vector<32x32xf32> -> vector<32x32xf32>
    %c0_36 = arith.constant 0 : index
    %c0_37 = arith.constant 0 : index
    %82 = vector.load %arg9[%c0_36, %c0_37] : memref<1x32xf32, #tpu.memory_space<vmem>>, vector<1x32xf32>
    %83 = vector.broadcast %82 : vector<1x32xf32> to vector<32x32xf32>
    %84 = arith.addf %81, %83 : vector<32x32xf32>
    %85 = vector.shape_cast %84 : vector<32x32xf32> to vector<8x4x32xf32>
    %86 = arith.addf %1, %85 : vector<8x4x32xf32>
    %c0_38 = arith.constant 0 : index
    %c0_39 = arith.constant 0 : index
    %c0_40 = arith.constant 0 : index
    %c0_41 = arith.constant 0 : index
    %87 = vector.load %arg11[%c0_38, %c0_39, %c0_40, %c0_41] : memref<1x8x4x32xf32, #tpu.memory_space<vmem>>, vector<1x8x4x32xf32>
    %88 = vector.shape_cast %87 : vector<1x8x4x32xf32> to vector<8x4x32xf32>
    %89 = vector.shape_cast %86 : vector<8x4x32xf32> to vector<1x8x4x32xf32>
    tpu.vector_store %arg11[%c0_38, %c0_39, %c0_40, %c0_41], %89 {strides = array<i32>} : memref<1x8x4x32xf32, #tpu.memory_space<vmem>>, vector<1x8x4x32xf32>,
    return
  }
  func.func @transform_0(%arg0: i32) -> (i32, i32, i32, i32) {
    %c0_i32 = arith.constant 0 : i32
    %c0_i32_0 = arith.constant 0 : i32
    %c0_i32_1 = arith.constant 0 : i32
    %c0_i32_2 = arith.constant 0 : i32
    return %arg0, %c0_i32, %c0_i32_0, %c0_i32_1 : i32, i32, i32, i32
  }
  func.func @transform_1(%arg0: i32) -> (i32, i32, i32) {
    %c0_i32 = arith.constant 0 : i32
    %c0_i32_0 = arith.constant 0 : i32
    %c0_i32_1 = arith.constant 0 : i32
    return %arg0, %c0_i32, %c0_i32_0 : i32, i32, i32
  }
  func.func @transform_2(%arg0: i32) -> (i32, i32) {
    %c0_i32 = arith.constant 0 : i32
    %c0_i32_0 = arith.constant 0 : i32
    %c0_i32_1 = arith.constant 0 : i32
    return %c0_i32, %c0_i32_0 : i32, i32
  }
  func.func @transform_3(%arg0: i32) -> (i32, i32) {
    %c0_i32 = arith.constant 0 : i32
    %c0_i32_0 = arith.constant 0 : i32
    %c0_i32_1 = arith.constant 0 : i32
    return %c0_i32, %c0_i32_0 : i32, i32
  }
  func.func @transform_4(%arg0: i32) -> (i32, i32) {
    %c0_i32 = arith.constant 0 : i32
    %c0_i32_0 = arith.constant 0 : i32
    %c0_i32_1 = arith.constant 0 : i32
    return %c0_i32, %c0_i32_0 : i32, i32
  }
  func.func @transform_5(%arg0: i32) -> (i32, i32) {
    %c0_i32 = arith.constant 0 : i32
    %c0_i32_0 = arith.constant 0 : i32
    %c0_i32_1 = arith.constant 0 : i32
    return %c0_i32, %c0_i32_0 : i32, i32
  }
  func.func @transform_6(%arg0: i32) -> (i32, i32) {
    %c0_i32 = arith.constant 0 : i32
    %c0_i32_0 = arith.constant 0 : i32
    %c0_i32_1 = arith.constant 0 : i32
    return %c0_i32, %c0_i32_0 : i32, i32
  }
  func.func @transform_7(%arg0: i32) -> (i32, i32) {
    %c0_i32 = arith.constant 0 : i32
    %c0_i32_0 = arith.constant 0 : i32
    %c0_i32_1 = arith.constant 0 : i32
    return %c0_i32, %c0_i32_0 : i32, i32
  }
  func.func @transform_8(%arg0: i32) -> (i32, i32) {
    %c0_i32 = arith.constant 0 : i32
    %c0_i32_0 = arith.constant 0 : i32
    %c0_i32_1 = arith.constant 0 : i32
    return %c0_i32, %c0_i32_0 : i32, i32
  }
  func.func @transform_9(%arg0: i32) -> (i32, i32) {
    %c0_i32 = arith.constant 0 : i32
    %c0_i32_0 = arith.constant 0 : i32
    %c0_i32_1 = arith.constant 0 : i32
    return %c0_i32, %c0_i32_0 : i32, i32
  }
  func.func @transform_10(%arg0: i32) -> (i32, i32, i32, i32) {
    %c0_i32 = arith.constant 0 : i32
    %c0_i32_0 = arith.constant 0 : i32
    %c0_i32_1 = arith.constant 0 : i32
    %c0_i32_2 = arith.constant 0 : i32
    return %arg0, %c0_i32, %c0_i32_0, %c0_i32_1 : i32, i32, i32, i32
  }
}

</mosaic_0001>

<llo_original>
// kernel: tpu_custom_call.1
$region0: #{tpu_custom_call.1}
  #allocation0 [shape = 'u32[]', space=smem, size = 0x4, offset = 0x4, fixed_abs, tag = 'smem constant byte address 0x4 - core index']
  #allocation1 [shape = 'u32[144,128]{1,0:T(1,128)}', space=vmem, size = 0x12000, scoped, tag = 'internal scratch']
  %s0 = inlined_call_operand.hbm [shape: f32[2,8,4,32], index: 0, kind: input, shape index: {}]
  %s1 = inlined_call_operand.vmem [shape: f32[2,8,4], index: 1, kind: input, shape index: {}]
  %s2 = inlined_call_operand.vmem [shape: f32[1,32], index: 2, kind: input, shape index: {}]
  %s3 = inlined_call_operand.vmem [shape: f32[1,32], index: 3, kind: input, shape index: {}]
  %s4 = inlined_call_operand.vmem [shape: f32[32,32], index: 4, kind: input, shape index: {}]
  %s5 = inlined_call_operand.hbm [shape: f32[32,32], index: 5, kind: input, shape index: {}]
  %s6 = inlined_call_operand.hbm [shape: f32[32,32], index: 6, kind: input, shape index: {}]
  %s7 = inlined_call_operand.hbm [shape: f32[32,32], index: 7, kind: input, shape index: {}]
  %s8 = inlined_call_operand.vmem [shape: f32[1,32], index: 8, kind: input, shape index: {}]
  %s9 = inlined_call_operand.hbm [shape: f32[32,32], index: 9, kind: input, shape index: {}]
  %s10 = inlined_call_operand.hbm [shape: f32[2,8,4,32], index: 10, kind: output, shape index: {}]
  %s11 = sld [smem:[#allocation0]]
  $region93: #{tpu_custom_call.1} parent=0
    _
  %s13 = ssub.s32 1, %s11
  %s14 = scalar_select 0, %s13, %s11
  $region1: #{tpu_custom_call.1} parent=0
    #allocation2 [shape = 'u8[32768]{0}', space=vmem, size = 0x8000, scoped, tag = 'input window, operand 0']
    #allocation3 [shape = 's32[2]{0}', space=sflag, size = 0x8, scoped, tag = 'scoped memory for tpu_custom_call.1']
    #allocation4 [shape = 's32[2]{0}', space=sflag, size = 0x8, scoped, tag = 'scoped memory for tpu_custom_call.1']
    #allocation5 [shape = 'u8[16384]{0}', space=vmem, size = 0x4000, scoped, tag = 'input window, operand 5, single buffered']
    #allocation6 [shape = 's32[1]{0}', space=sflag, size = 0x4, scoped, tag = 'scoped memory for tpu_custom_call.1']
    #allocation7 [shape = 'u8[16384]{0}', space=vmem, size = 0x4000, scoped, tag = 'input window, operand 6, single buffered']
    #allocation8 [shape = 'u8[16384]{0}', space=vmem, size = 0x4000, scoped, tag = 'input window, operand 7, single buffered']
    #allocation9 [shape = 's32[1]{0}', space=sflag, size = 0x4, scoped, tag = 'scoped memory for tpu_custom_call.1']
    #allocation10 [shape = 'u8[16384]{0}', space=vmem, size = 0x4000, scoped, tag = 'input window, operand 9, single buffered']
    #allocation11 [shape = 'u8[32768]{0}', space=vmem, size = 0x8000, scoped, tag = 'output window, operand 0']
    %15 = vsyncpa [#allocation3], 0
    %s16 = scalar_lea.sflag [#allocation3], 1
    %17 = vsyncpa %s16, 0
    %18 = vsyncpa [#allocation6], 0
    %19 = vsyncpa [#allocation9], 0
    %20 = vsyncpa [#allocation4], 0
    %s21 = scalar_lea.sflag [#allocation4], 1
    %22 = vsyncpa %s21, 0
    loop: start=0, step=1, limit=4
    $region2: #{tpu_custom_call.1} parent=1 // loop_pre_header
      _
    $region3: #{tpu_custom_call.1} parent=1 // loop_header
      %s24 = sphi 0, %s28
      %p25 = scmp.ge.s32.totalorder %s24, 4
      %s34 = sphi 0, %s36
      %s37 = sphi 0, %s34
      %s38 = sphi 0, %s37
      %s54 = sphi 0, %s38
      %s60 = sphi 0, %s62
      %s63 = sphi 0, %s60
      %s64 = sphi 0, %s63
      %s80 = sphi 0, %s64
      %s84 = sphi 0, %s84
      %s86 = sphi 0, %s84
      %s87 = sphi 0, %s86
      %s101 = sphi 0, %s87
      %s105 = sphi 0, %s105
      %s107 = sphi 0, %s105
      %s108 = sphi 0, %s107
      %s122 = sphi 0, %s108
      %s126 = sphi 0, %s126
      %s128 = sphi 0, %s126
      %s129 = sphi 0, %s128
      %s143 = sphi 0, %s129
      %s147 = sphi 0, %s147
      %s149 = sphi 0, %s147
      %s150 = sphi 0, %s149
      %s164 = sphi 0, %s150
      %s168 = sphi 0, %s168
      %s170 = sphi 0, %s168
      %s171 = sphi 0, %s170
      %s185 = sphi 0, %s171
      %s189 = sphi 0, %s189
      %s191 = sphi 0, %s189
      %s192 = sphi 0, %s191
      %s206 = sphi 0, %s192
      %s210 = sphi 0, %s210
      %s212 = sphi 0, %s210
      %s213 = sphi 0, %s212
      %s227 = sphi 0, %s213
      %s231 = sphi 0, %s231
      %s233 = sphi 0, %s231
      %s234 = sphi 0, %s233
      %s248 = sphi 0, %s234
      %s254 = sphi 0, %s256
      %s257 = sphi 0, %s254
      %s258 = sphi 0, %s257
      %s274 = sphi 0, %s258
    $region4: #{tpu_custom_call.1} parent=1 // loop_header_branch
      %27 = sbr.rel (%p25) target = $region8
    $region5: #{tpu_custom_call.1} parent=1 // loop_body
      %s29 = ssub.s32 %s24, 1
      %s30 = ssub.s32 %s24, 2
      %s31 = sadd.s32 %s24, 1
      %s32 = ssub.s32 %s24, %s31
      %p33 = scmp.eq.s32.totalorder %s32, 0
      %s35 = sadd.s32 %s34, 1
      %s36 = scalar_select %p33, %s34, %s35
      %p39 = pneg %p33
      %p40 = scmp.eq.s32.totalorder %s24, 1
      %p41 = por %p39, %p40
      %p42 = scmp.ne.s32.totalorder %s34, %s37
      %p43 = scmp.eq.s32.totalorder %s24, 0
      %p44 = por %p42, %p43
      %p45 = scmp.ne.s32.totalorder %s34, %s37
      %p46 = scmp.eq.s32.totalorder %s29, 1
      %p47 = por %p45, %p46
      %p48 = scmp.ne.s32.totalorder %s37, %s38
      %p49 = scmp.eq.s32.totalorder %s29, 0
      %p50 = por %p48, %p49
      %p51 = scmp.ne.s32.totalorder %s37, %s38
      %p52 = scmp.eq.s32.totalorder %s30, 1
      %p53 = por %p51, %p52
      %p55 = scmp.ne.s32.totalorder %s38, %s54
      %p56 = scmp.eq.s32.totalorder %s30, 0
      %p57 = por %p55, %p56
      %s58 = ssub.s32 %s24, %s31
      %p59 = scmp.eq.s32.totalorder %s58, 0
      %s61 = sadd.s32 %s60, 1
      %s62 = scalar_select %p59, %s60, %s61
      %p65 = pneg %p59
      %p66 = scmp.eq.s32.totalorder %s24, 1
      %p67 = por %p65, %p66
      %p68 = scmp.ne.s32.totalorder %s60, %s63
      %p69 = scmp.eq.s32.totalorder %s24, 0
      %p70 = por %p68, %p69
      %p71 = scmp.ne.s32.totalorder %s60, %s63
      %p72 = scmp.eq.s32.totalorder %s29, 1
      %p73 = por %p71, %p72
      %p74 = scmp.ne.s32.totalorder %s63, %s64
      %p75 = scmp.eq.s32.totalorder %s29, 0
      %p76 = por %p74, %p75
      %p77 = scmp.ne.s32.totalorder %s63, %s64
      %p78 = scmp.eq.s32.totalorder %s30, 1
      %p79 = por %p77, %p78
      %p81 = scmp.ne.s32.totalorder %s64, %s80
      %p82 = scmp.eq.s32.totalorder %s30, 0
      %p83 = por %p81, %p82
      %s85 = sadd.s32 %s84, 1
      %p88 = scmp.eq.s32.totalorder %s24, 1
      %p89 = scmp.ne.s32.totalorder %s84, %s86
      %p90 = scmp.eq.s32.totalorder %s24, 0
      %p91 = por %p89, %p90
      %p92 = scmp.ne.s32.totalorder %s84, %s86
      %p93 = scmp.eq.s32.totalorder %s29, 1
      %p94 = por %p92, %p93
      %p95 = scmp.ne.s32.totalorder %s86, %s87
      %p96 = scmp.eq.s32.totalorder %s29, 0
      %p97 = por %p95, %p96
      %p98 = scmp.ne.s32.totalorder %s86, %s87
      %p99 = scmp.eq.s32.totalorder %s30, 1
      %p100 = por %p98, %p99
      %p102 = scmp.ne.s32.totalorder %s87, %s101
      %p103 = scmp.eq.s32.totalorder %s30, 0
      %p104 = por %p102, %p103
      %s106 = sadd.s32 %s105, 1
      %p109 = scmp.eq.s32.totalorder %s24, 1
      %p110 = scmp.ne.s32.totalorder %s105, %s107
      %p111 = scmp.eq.s32.totalorder %s24, 0
      %p112 = por %p110, %p111
      %p113 = scmp.ne.s32.totalorder %s105, %s107
      %p114 = scmp.eq.s32.totalorder %s29, 1
      %p115 = por %p113, %p114
      %p116 = scmp.ne.s32.totalorder %s107, %s108
      %p117 = scmp.eq.s32.totalorder %s29, 0
      %p118 = por %p116, %p117
      %p119 = scmp.ne.s32.totalorder %s107, %s108
      %p120 = scmp.eq.s32.totalorder %s30, 1
      %p121 = por %p119, %p120
      %p123 = scmp.ne.s32.totalorder %s108, %s122
      %p124 = scmp.eq.s32.totalorder %s30, 0
      %p125 = por %p123, %p124
      %s127 = sadd.s32 %s126, 1
      %p130 = scmp.eq.s32.totalorder %s24, 1
      %p131 = scmp.ne.s32.totalorder %s126, %s128
      %p132 = scmp.eq.s32.totalorder %s24, 0
      %p133 = por %p131, %p132
      %p134 = scmp.ne.s32.totalorder %s126, %s128
      %p135 = scmp.eq.s32.totalorder %s29, 1
      %p136 = por %p134, %p135
      %p137 = scmp.ne.s32.totalorder %s128, %s129
      %p138 = scmp.eq.s32.totalorder %s29, 0
      %p139 = por %p137, %p138
      %p140 = scmp.ne.s32.totalorder %s128, %s129
      %p141 = scmp.eq.s32.totalorder %s30, 1
      %p142 = por %p140, %p141
      %p144 = scmp.ne.s32.totalorder %s129, %s143
      %p145 = scmp.eq.s32.totalorder %s30, 0
      %p146 = por %p144, %p145
      %s148 = sadd.s32 %s147, 1
      %p151 = scmp.eq.s32.totalorder %s24, 1
      %p152 = scmp.ne.s32.totalorder %s147, %s149
      %p153 = scmp.eq.s32.totalorder %s24, 0
      %p154 = por %p152, %p153
      %p155 = scmp.ne.s32.totalorder %s147, %s149
      %p156 = scmp.eq.s32.totalorder %s29, 1
      %p157 = por %p155, %p156
      %p158 = scmp.ne.s32.totalorder %s149, %s150
      %p159 = scmp.eq.s32.totalorder %s29, 0
      %p160 = por %p158, %p159
      %p161 = scmp.ne.s32.totalorder %s149, %s150
      %p162 = scmp.eq.s32.totalorder %s30, 1
      %p163 = por %p161, %p162
      %p165 = scmp.ne.s32.totalorder %s150, %s164
      %p166 = scmp.eq.s32.totalorder %s30, 0
      %p167 = por %p165, %p166
      %s169 = sadd.s32 %s168, 1
      %p172 = scmp.eq.s32.totalorder %s24, 1
      %p173 = scmp.ne.s32.totalorder %s168, %s170
      %p174 = scmp.eq.s32.totalorder %s24, 0
      %p175 = por %p173, %p174
      %p176 = scmp.ne.s32.totalorder %s168, %s170
      %p177 = scmp.eq.s32.totalorder %s29, 1
      %p178 = por %p176, %p177
      %p179 = scmp.ne.s32.totalorder %s170, %s171
      %p180 = scmp.eq.s32.totalorder %s29, 0
      %p181 = por %p179, %p180
      %p182 = scmp.ne.s32.totalorder %s170, %s171
      %p183 = scmp.eq.s32.totalorder %s30, 1
      %p184 = por %p182, %p183
      %p186 = scmp.ne.s32.totalorder %s171, %s185
      %p187 = scmp.eq.s32.totalorder %s30, 0
      %p188 = por %p186, %p187
      %s190 = sadd.s32 %s189, 1
      %p193 = scmp.eq.s32.totalorder %s24, 1
      %p194 = scmp.ne.s32.totalorder %s189, %s191
      %p195 = scmp.eq.s32.totalorder %s24, 0
      %p196 = por %p194, %p195
      %p197 = scmp.ne.s32.totalorder %s189, %s191
      %p198 = scmp.eq.s32.totalorder %s29, 1
      %p199 = por %p197, %p198
      %p200 = scmp.ne.s32.totalorder %s191, %s192
      %p201 = scmp.eq.s32.totalorder %s29, 0
      %p202 = por %p200, %p201
      %p203 = scmp.ne.s32.totalorder %s191, %s192
      %p204 = scmp.eq.s32.totalorder %s30, 1
      %p205 = por %p203, %p204
      %p207 = scmp.ne.s32.totalorder %s192, %s206
      %p208 = scmp.eq.s32.totalorder %s30, 0
      %p209 = por %p207, %p208
      %s211 = sadd.s32 %s210, 1
      %p214 = scmp.eq.s32.totalorder %s24, 1
      %p215 = scmp.ne.s32.totalorder %s210, %s212
      %p216 = scmp.eq.s32.totalorder %s24, 0
      %p217 = por %p215, %p216
      %p218 = scmp.ne.s32.totalorder %s210, %s212
      %p219 = scmp.eq.s32.totalorder %s29, 1
      %p220 = por %p218, %p219
      %p221 = scmp.ne.s32.totalorder %s212, %s213
      %p222 = scmp.eq.s32.totalorder %s29, 0
      %p223 = por %p221, %p222
      %p224 = scmp.ne.s32.totalorder %s212, %s213
      %p225 = scmp.eq.s32.totalorder %s30, 1
      %p226 = por %p224, %p225
      %p228 = scmp.ne.s32.totalorder %s213, %s227
      %p229 = scmp.eq.s32.totalorder %s30, 0
      %p230 = por %p228, %p229
      %s232 = sadd.s32 %s231, 1
      %p235 = scmp.eq.s32.totalorder %s24, 1
      %p236 = scmp.ne.s32.totalorder %s231, %s233
      %p237 = scmp.eq.s32.totalorder %s24, 0
      %p238 = por %p236, %p237
      %p239 = scmp.ne.s32.totalorder %s231, %s233
      %p240 = scmp.eq.s32.totalorder %s29, 1
      %p241 = por %p239, %p240
      %p242 = scmp.ne.s32.totalorder %s233, %s234
      %p243 = scmp.eq.s32.totalorder %s29, 0
      %p244 = por %p242, %p243
      %p245 = scmp.ne.s32.totalorder %s233, %s234
      %p246 = scmp.eq.s32.totalorder %s30, 1
      %p247 = por %p245, %p246
      %p249 = scmp.ne.s32.totalorder %s234, %s248
      %p250 = scmp.eq.s32.totalorder %s30, 0
      %p251 = por %p249, %p250
      %s252 = ssub.s32 %s24, %s31
      %p253 = scmp.eq.s32.totalorder %s252, 0
      %s255 = sadd.s32 %s254, 1
      %s256 = scalar_select %p253, %s254, %s255
      %p259 = pneg %p253
      %p260 = scmp.eq.s32.totalorder %s24, 1
      %p261 = por %p259, %p260
      %p262 = scmp.ne.s32.totalorder %s254, %s257
      %p263 = scmp.eq.s32.totalorder %s24, 0
      %p264 = por %p262, %p263
      %p265 = scmp.ne.s32.totalorder %s254, %s257
      %p266 = scmp.eq.s32.totalorder %s29, 1
      %p267 = por %p265, %p266
      %p268 = scmp.ne.s32.totalorder %s257, %s258
      %p269 = scmp.eq.s32.totalorder %s29, 0
      %p270 = por %p268, %p269
      %p271 = scmp.ne.s32.totalorder %s257, %s258
      %p272 = scmp.eq.s32.totalorder %s30, 1
      %p273 = por %p271, %p272
      %p275 = scmp.ne.s32.totalorder %s258, %s274
      %p276 = scmp.eq.s32.totalorder %s30, 0
      %p277 = por %p275, %p276
      %p278 = scmp.le.s32.totalorder 1, %s24
      %p279 = scmp.lt.s32.totalorder %s24, 3
      %p280 = pnand %p278, %p279
      %p281 = pneg %p280
      // Predicated region
      $region9: #{tpu_custom_call.1} parent=5 // pred_check
        _
      $region10: #{tpu_custom_call.1} parent=5 // pred_check_branch
        %283 = sbr.rel (%p280) target = $region12
      $region11: #{tpu_custom_call.1} parent=5 // pred_region
        %s284 = ssub.s32 %s24, 1
        // Predicated region
        $region13: #{tpu_custom_call.1} parent=11 // pred_check
          %p285 = pneg %p97
        $region14: #{tpu_custom_call.1} parent=11 // pred_check_branch
          %287 = sbr.rel (%p285) target = $region16
        $region15: #{tpu_custom_call.1} parent=11 // pred_region
          _
        $region16: #{tpu_custom_call.1} parent=11 // pred_fallthru
          _
        // Predicated region
        $region17: #{tpu_custom_call.1} parent=11 // pred_check
          %p288 = pneg %p118
        $region18: #{tpu_custom_call.1} parent=11 // pred_check_branch
          %290 = sbr.rel (%p288) target = $region20
        $region19: #{tpu_custom_call.1} parent=11 // pred_region
          _
        $region20: #{tpu_custom_call.1} parent=11 // pred_fallthru
          _
        // Predicated region
        $region21: #{tpu_custom_call.1} parent=11 // pred_check
          %p291 = pneg %p139
        $region22: #{tpu_custom_call.1} parent=11 // pred_check_branch
          %293 = sbr.rel (%p291) target = $region24
        $region23: #{tpu_custom_call.1} parent=11 // pred_region
          _
        $region24: #{tpu_custom_call.1} parent=11 // pred_fallthru
          _
        // Predicated region
        $region25: #{tpu_custom_call.1} parent=11 // pred_check
          %p294 = pneg %p160
        $region26: #{tpu_custom_call.1} parent=11 // pred_check_branch
          %296 = sbr.rel (%p294) target = $region28
        $region27: #{tpu_custom_call.1} parent=11 // pred_region
          %s298 = ssub.s32 512, 512
          %299 = vsyncadd [#allocation6], %s298
          %s300 = sshll.u32 [#allocation5], 4
          %s301 = int_to_ptr.vmem [resolvable:$true] %s300
          %306 = dma.hbm_to_vmem [thread:$0]  %s5, 512, %s301, [#allocation6], 128, 128, 8
        $region28: #{tpu_custom_call.1} parent=11 // pred_fallthru
          _
        // Predicated region
        $region29: #{tpu_custom_call.1} parent=11 // pred_check
          %p307 = pneg %p181
        $region30: #{tpu_custom_call.1} parent=11 // pred_check_branch
          %309 = sbr.rel (%p307) target = $region32
        $region31: #{tpu_custom_call.1} parent=11 // pred_region
          %s311 = ssub.s32 512, 512
          %312 = vsyncadd [#allocation6], %s311
          %s313 = sshll.u32 [#allocation7], 4
          %s314 = int_to_ptr.vmem [resolvable:$true] %s313
          %319 = dma.hbm_to_vmem [thread:$0]  %s6, 512, %s314, [#allocation6], 128, 128, 8
        $region32: #{tpu_custom_call.1} parent=11 // pred_fallthru
          _
        // Predicated region
        $region33: #{tpu_custom_call.1} parent=11 // pred_check
          %p320 = pneg %p202
        $region34: #{tpu_custom_call.1} parent=11 // pred_check_branch
          %322 = sbr.rel (%p320) target = $region36
        $region35: #{tpu_custom_call.1} parent=11 // pred_region
          %s324 = ssub.s32 512, 512
          %325 = vsyncadd [#allocation9], %s324
          %s326 = sshll.u32 [#allocation8], 4
          %s327 = int_to_ptr.vmem [resolvable:$true] %s326
          %332 = dma.hbm_to_vmem [thread:$0]  %s7, 512, %s327, [#allocation9], 128, 128, 8
        $region36: #{tpu_custom_call.1} parent=11 // pred_fallthru
          _
        // Predicated region
        $region37: #{tpu_custom_call.1} parent=11 // pred_check
          %p333 = pneg %p223
        $region38: #{tpu_custom_call.1} parent=11 // pred_check_branch
          %335 = sbr.rel (%p333) target = $region40
        $region39: #{tpu_custom_call.1} parent=11 // pred_region
          _
        $region40: #{tpu_custom_call.1} parent=11 // pred_fallthru
          _
        // Predicated region
        $region41: #{tpu_custom_call.1} parent=11 // pred_check
          %p336 = pneg %p244
        $region42: #{tpu_custom_call.1} parent=11 // pred_check_branch
          %338 = sbr.rel (%p336) target = $region44
        $region43: #{tpu_custom_call.1} parent=11 // pred_region
          %s340 = ssub.s32 512, 512
          %341 = vsyncadd [#allocation9], %s340
          %s342 = sshll.u32 [#allocation10], 4
          %s343 = int_to_ptr.vmem [resolvable:$true] %s342
          %348 = dma.hbm_to_vmem [thread:$0]  %s9, 512, %s343, [#allocation9], 128, 128, 8
        $region44: #{tpu_custom_call.1} parent=11 // pred_fallthru
          _
      $region12: #{tpu_custom_call.1} parent=5 // pred_fallthru
        _
      %p349 = scmp.lt.s32.totalorder %s24, 2
      // Predicated region
      $region45: #{tpu_custom_call.1} parent=5 // pred_check
        %p350 = pneg %p349
      $region46: #{tpu_custom_call.1} parent=5 // pred_check_branch
        %352 = sbr.rel (%p350) target = $region48
      $region47: #{tpu_custom_call.1} parent=5 // pred_region
        // Predicated region
        $region49: #{tpu_custom_call.1} parent=47 // pred_check
          %p353 = pneg %p44
        $region50: #{tpu_custom_call.1} parent=47 // pred_check_branch
          %355 = sbr.rel (%p353) target = $region52
        $region51: #{tpu_custom_call.1} parent=47 // pred_region
          %s356 = sand.u32 %s34, 1
          %s357 = scalar_lea.sflag [#allocation3], %s356
          %s358 = sand.u32 %s34, 1
          %s359 = smul.addr %s358, 32
          %s360 = scalar_lea.vmem [#allocation2], %s359
          %s362 = ssub.s32 512, 512
          %363 = vsyncadd %s357, %s362
          %s364 = smul.addr %s24, 8
          %s365 = smul.addr %s364, 64
          %s366 = scalar_lea.hbm %s0, %s365
          %s367 = sshll.u32 %s360, 4
          %s368 = int_to_ptr.vmem [resolvable:$true] %s367
          %373 = dma.hbm_to_vmem [thread:$0]  %s366, 512, %s368, %s357, 64, 64, 4
        $region52: #{tpu_custom_call.1} parent=47 // pred_fallthru
          _
        // Predicated region
        $region53: #{tpu_custom_call.1} parent=47 // pred_check
          %p374 = pneg %p70
        $region54: #{tpu_custom_call.1} parent=47 // pred_check_branch
          %376 = sbr.rel (%p374) target = $region56
        $region55: #{tpu_custom_call.1} parent=47 // pred_region
          %p377 = scmp.lt.s32.totalorder %s24, 1
          %s378 = scalar_select %p377, %s24, 1
          %s379 = smul.addr %s378, 8
          %s380 = scalar_lea.vmem %s1, %s379
        $region56: #{tpu_custom_call.1} parent=47 // pred_fallthru
          _
      $region48: #{tpu_custom_call.1} parent=5 // pred_fallthru
        _
      %p381 = scmp.le.s32.totalorder 1, %s24
      %p382 = scmp.lt.s32.totalorder %s24, 3
      %p383 = pnand %p381, %p382
      %p384 = pneg %p383
      // Predicated region
      $region57: #{tpu_custom_call.1} parent=5 // pred_check
        _
      $region58: #{tpu_custom_call.1} parent=5 // pred_check_branch
        %386 = sbr.rel (%p383) target = $region60
      $region59: #{tpu_custom_call.1} parent=5 // pred_region
        %s387 = ssub.s32 %s24, 1
        %s388 = sand.u32 %s37, 1
        %s389 = scalar_lea.sflag [#allocation3], %s388
        %s390 = sand.u32 %s37, 1
        %s391 = smul.addr %s390, 32
        %s392 = scalar_lea.vmem [#allocation2], %s391
        // Predicated region
        $region61: #{tpu_custom_call.1} parent=59 // pred_check
          %p393 = pneg %p50
        $region62: #{tpu_custom_call.1} parent=59 // pred_check_branch
          %395 = sbr.rel (%p393) target = $region64
        $region63: #{tpu_custom_call.1} parent=59 // pred_region
          %396 = dma.done %s389, 512
        $region64: #{tpu_custom_call.1} parent=59 // pred_fallthru
          _
        // Predicated region
        $region65: #{tpu_custom_call.1} parent=59 // pred_check
          %p397 = pneg %p160
        $region66: #{tpu_custom_call.1} parent=59 // pred_check_branch
          %399 = sbr.rel (%p397) target = $region68
        $region67: #{tpu_custom_call.1} parent=59 // pred_region
          %400 = dma.done [#allocation6], 512
        $region68: #{tpu_custom_call.1} parent=59 // pred_fallthru
          _
        // Predicated region
        $region69: #{tpu_custom_call.1} parent=59 // pred_check
          %p401 = pneg %p181
        $region70: #{tpu_custom_call.1} parent=59 // pred_check_branch
          %403 = sbr.rel (%p401) target = $region72
        $region71: #{tpu_custom_call.1} parent=59 // pred_region
          %404 = dma.done [#allocation6], 512
        $region72: #{tpu_custom_call.1} parent=59 // pred_fallthru
          _
        // Predicated region
        $region73: #{tpu_custom_call.1} parent=59 // pred_check
          %p405 = pneg %p202
        $region74: #{tpu_custom_call.1} parent=59 // pred_check_branch
          %407 = sbr.rel (%p405) target = $region76
        $region75: #{tpu_custom_call.1} parent=59 // pred_region
          %408 = dma.done [#allocation9], 512
        $region76: #{tpu_custom_call.1} parent=59 // pred_fallthru
          _
        // Predicated region
        $region77: #{tpu_custom_call.1} parent=59 // pred_check
          %p409 = pneg %p244
        $region78: #{tpu_custom_call.1} parent=59 // pred_check_branch
          %411 = sbr.rel (%p409) target = $region80
        $region79: #{tpu_custom_call.1} parent=59 // pred_region
          %412 = dma.done [#allocation9], 512
        $region80: #{tpu_custom_call.1} parent=59 // pred_fallthru
          _
        %s413 = sand.u32 %s37, 1
        %s414 = scalar_lea.sflag [#allocation3], %s413
        %s415 = sand.u32 %s37, 1
        %s416 = smul.addr %s415, 32
        %s417 = scalar_lea.vmem [#allocation2], %s416
        %p418 = pneg %p50
        %p419 = pneg %p47
        %p420 = scmp.lt.s32.totalorder %s29, 1
        %s421 = scalar_select %p420, %s29, 1
        %s422 = smul.addr %s421, 8
        %s423 = scalar_lea.vmem %s1, %s422
        %p424 = pneg %p76
        %p425 = pneg %p73
        %p426 = pneg %p97
        %p427 = pneg %p94
        %p428 = pneg %p118
        %p429 = pneg %p115
        %p430 = pneg %p139
        %p431 = pneg %p136
        %p432 = pneg %p160
        %p433 = pneg %p157
        %p434 = pneg %p181
        %p435 = pneg %p178
        %p436 = pneg %p202
        %p437 = pneg %p199
        %p438 = pneg %p223
        %p439 = pneg %p220
        %p440 = pneg %p244
        %p441 = pneg %p241
        %p442 = pneg %p270
        %p443 = pneg %p267
        %s444 = sand.u32 %s257, 1
        %s445 = scalar_lea.sflag [#allocation4], %s444
        %s446 = sand.u32 %s257, 1
        %s447 = smul.addr %s446, 32
        %s448 = scalar_lea.vmem [#allocation11], %s447
        %p449 = scmp.lt.s32.totalorder %s29, 1
        %s450 = scalar_select %p449, %s29, 1
        %s451 = smul.addr %s450, 8
        %s452 = scalar_lea.vmem %s1, %s451
        %v453 = vld [vmem:[%s392] sm:$0xf]
        %v454 = vld [vmem:[%s392 + $0x4] sm:$0xf]
        %v455 = vld [vmem:[%s392 + $0x8] sm:$0xf]
        %v456 = vld [vmem:[%s392 + $0xc] sm:$0xf]
        %v457 = vld [vmem:[%s392 + $0x10] sm:$0xf]
        %v458 = vld [vmem:[%s392 + $0x14] sm:$0xf]
        %v459 = vld [vmem:[%s392 + $0x18] sm:$0xf]
        %v460 = vld [vmem:[%s392 + $0x1c] sm:$0xf]
        %vm461 = vcmask 257024
        %v462 = vsel %vm461, %v453, 0.0
        %463 = vadd.xlane.f32.xlu0 %v462
        %v464 = vpop.xlane.xlu0 %463
        %v465 = vsel %vm461, %v454, 0.0
        %466 = vadd.xlane.f32.xlu0 %v465
        %v467 = vpop.xlane.xlu0 %466
        %v468 = vsel %vm461, %v455, 0.0
        %469 = vadd.xlane.f32.xlu0 %v468
        %v470 = vpop.xlane.xlu0 %469
        %v471 = vsel %vm461, %v456, 0.0
        %472 = vadd.xlane.f32.xlu0 %v471
        %v473 = vpop.xlane.xlu0 %472
        %v474 = vsel %vm461, %v457, 0.0
        %475 = vadd.xlane.f32.xlu0 %v474
        %v476 = vpop.xlane.xlu0 %475
        %v477 = vsel %vm461, %v458, 0.0
        %478 = vadd.xlane.f32.xlu0 %v477
        %v479 = vpop.xlane.xlu0 %478
        %v480 = vsel %vm461, %v459, 0.0
        %481 = vadd.xlane.f32.xlu0 %v480
        %v482 = vpop.xlane.xlu0 %481
        %v483 = vsel %vm461, %v460, 0.0
        %484 = vadd.xlane.f32.xlu0 %v483
        %v485 = vpop.xlane.xlu0 %484
        %v486 = vrcp.pop 32.0
        %v487 = vmul.f32 %v464, %v486
        %v488 = vmul.f32 %v467, %v486
        %v489 = vmul.f32 %v470, %v486
        %v490 = vmul.f32 %v473, %v486
        %v491 = vmul.f32 %v476, %v486
        %v492 = vmul.f32 %v479, %v486
        %v493 = vmul.f32 %v482, %v486
        %v494 = vmul.f32 %v485, %v486
        %v495 = vsub.f32 %v453, %v487
        %v496 = vsub.f32 %v454, %v488
        %v497 = vsub.f32 %v455, %v489
        %v498 = vsub.f32 %v456, %v490
        %v499 = vsub.f32 %v457, %v491
        %v500 = vsub.f32 %v458, %v492
        %v501 = vsub.f32 %v459, %v493
        %v502 = vsub.f32 %v460, %v494
        %v503 = vmul.f32 %v495, %v495
        %v504 = vmul.f32 %v496, %v496
        %v505 = vmul.f32 %v497, %v497
        %v506 = vmul.f32 %v498, %v498
        %v507 = vmul.f32 %v499, %v499
        %v508 = vmul.f32 %v500, %v500
        %v509 = vmul.f32 %v501, %v501
        %v510 = vmul.f32 %v502, %v502
        %v511 = vsel %vm461, %v503, 0.0
        %512 = vadd.xlane.f32.xlu0 %v511
        %v513 = vpop.xlane.xlu0 %512
        %v514 = vsel %vm461, %v504, 0.0
        %515 = vadd.xlane.f32.xlu0 %v514
        %v516 = vpop.xlane.xlu0 %515
        %v517 = vsel %vm461, %v505, 0.0
        %518 = vadd.xlane.f32.xlu0 %v517
        %v519 = vpop.xlane.xlu0 %518
        %v520 = vsel %vm461, %v506, 0.0
        %521 = vadd.xlane.f32.xlu0 %v520
        %v522 = vpop.xlane.xlu0 %521
        %v523 = vsel %vm461, %v507, 0.0
        %524 = vadd.xlane.f32.xlu0 %v523
        %v525 = vpop.xlane.xlu0 %524
        %v526 = vsel %vm461, %v508, 0.0
        %527 = vadd.xlane.f32.xlu0 %v526
        %v528 = vpop.xlane.xlu0 %527
        %v529 = vsel %vm461, %v509, 0.0
        %530 = vadd.xlane.f32.xlu0 %v529
        %v531 = vpop.xlane.xlu0 %530
        %v532 = vsel %vm461, %v510, 0.0
        %533 = vadd.xlane.f32.xlu0 %v532
        %v534 = vpop.xlane.xlu0 %533
        %v535 = vmul.f32 %v513, %v486
        %v536 = vmul.f32 %v516, %v486
        %v537 = vmul.f32 %v519, %v486
        %v538 = vmul.f32 %v522, %v486
        %v539 = vmul.f32 %v525, %v486
        %v540 = vmul.f32 %v528, %v486
        %v541 = vmul.f32 %v531, %v486
        %v542 = vmul.f32 %v534, %v486
        %v543 = vadd.f32 %v535, 1e-05
        %v544 = vadd.f32 %v536, 1e-05
        %v545 = vadd.f32 %v537, 1e-05
        %v546 = vadd.f32 %v538, 1e-05
        %v547 = vadd.f32 %v539, 1e-05
        %v548 = vadd.f32 %v540, 1e-05
        %v549 = vadd.f32 %v541, 1e-05
        %v550 = vadd.f32 %v542, 1e-05
        %v551 = vrsqrt.pop %v543
        %v552 = vrsqrt.pop %v544
        %v553 = vrsqrt.pop %v545
        %v554 = vrsqrt.pop %v546
        %v555 = vrsqrt.pop %v547
        %v556 = vrsqrt.pop %v548
        %v557 = vrsqrt.pop %v549
        %v558 = vrsqrt.pop %v550
        %v559 = vmul.f32 %v495, %v551
        %v560 = vmul.f32 %v496, %v552
        %v561 = vmul.f32 %v497, %v553
        %v562 = vmul.f32 %v498, %v554
        %v563 = vmul.f32 %v499, %v555
        %v564 = vmul.f32 %v500, %v556
        %v565 = vmul.f32 %v501, %v557
        %v566 = vmul.f32 %v502, %v558
        %v567 = vld [vmem:[%s2] sm:$0x1]
        %v569 = vlaneseq
        %v570 = vshrl.u32 %v569, 7
        %v571 = vsub.s32 0, %v570
        %v572 = vrot.slane %v567, %v571
        %v574 = vmul.f32 %v559, %v572
        %v575 = vmul.f32 %v560, %v572
        %v576 = vmul.f32 %v561, %v572
        %v577 = vmul.f32 %v562, %v572
        %v578 = vmul.f32 %v563, %v572
        %v579 = vmul.f32 %v564, %v572
        %v580 = vmul.f32 %v565, %v572
        %v581 = vmul.f32 %v566, %v572
        %v582 = vld [vmem:[%s3] sm:$0x1]
        %v584 = vlaneseq
        %v585 = vshrl.u32 %v584, 7
        %v586 = vsub.s32 0, %v585
        %v587 = vrot.slane %v582, %v586
        %v589 = vadd.f32 %v574, %v587
        %v590 = vadd.f32 %v575, %v587
        %v591 = vadd.f32 %v576, %v587
        %v592 = vadd.f32 %v577, %v587
        %v593 = vadd.f32 %v578, %v587
        %v594 = vadd.f32 %v579, %v587
        %v595 = vadd.f32 %v580, %v587
        %v596 = vadd.f32 %v581, %v587
        %v597 = vld [vmem:[%s4] sm:$0xff]
        %v598 = vld [vmem:[%s4 + $0x8] sm:$0xff]
        %v599 = vld [vmem:[%s4 + $0x10] sm:$0xff]
        %v600 = vld [vmem:[%s4 + $0x18] sm:$0xff]
        %v609 = vrot.slane %v590, 7
        %vm610 = vcmask 1041409
        %v611 = vsel %vm610, %v609, %v589
        %v612 = vrot.slane %v591, 6
        %vm613 = vcmask 1042434
        %v614 = vsel %vm613, %v612, %v611
        %v615 = vrot.slane %v592, 5
        %vm616 = vcmask 1043459
        %v617 = vsel %vm616, %v615, %v614
        %v618 = vrot.slane %v593, 4
        %vm619 = vcmask 1044484
        %v620 = vsel %vm619, %v618, %v617
        %v621 = vrot.slane %v594, 3
        %vm622 = vcmask 1045509
        %v623 = vsel %vm622, %v621, %v620
        %v624 = vrot.slane %v595, 2
        %vm625 = vcmask 1046534
        %v626 = vsel %vm625, %v624, %v623
        %v627 = vrot.slane %v596, 1
        %vm628 = vcmask 1047559
        %v629 = vsel %vm628, %v627, %v626
        %vm630 = vcmask 261120
        %v631 = vsel %vm630, %v629, 0
        %633 = vmatprep.subr.mxu0 0.0
        %634 = vmatpush1.msra.mxu0 %v597
        %635 = vmatprep.subr.mxu0 0.0
        %636 = vmatpush1.msra.mxu0 %v598
        %637 = vmatprep.subr.mxu0 0.0
        %638 = vmatpush1.msra.mxu0 %v599
        %639 = vmatprep.subr.mxu0 0.0
        %640 = vmatpush1.msra.mxu0 %v600
        %641 = vmatprep.subr.mxu0 0.0
        %642 = vmatpush1.msra.mxu0 0.0
        %643 = vmatprep.subr.mxu0 0.0
        %644 = vmatpush1.msra.mxu0 0.0
        %645 = vmatprep.subr.mxu0 0.0
        %646 = vmatpush1.msra.mxu0 0.0
        %647 = vmatprep.subr.mxu0 0.0
        %648 = vmatpush1.msra.mxu0 0.0
        %649 = vmatprep.subr.mxu0 0.0
        %650 = vmatpush1.msra.mxu0 0.0
        %651 = vmatprep.subr.mxu0 0.0
        %652 = vmatpush1.msra.mxu0 0.0
        %653 = vmatprep.subr.mxu0 0.0
        %654 = vmatpush1.msra.mxu0 0.0
        %655 = vmatprep.subr.mxu0 0.0
        %656 = vmatpush1.msra.mxu0 0.0
        %657 = vmatprep.subr.mxu0 0.0
        %658 = vmatpush1.msra.mxu0 0.0
        %659 = vmatprep.subr.mxu0 0.0
        %660 = vmatpush1.msra.mxu0 0.0
        %661 = vmatprep.subr.mxu0 0.0
        %662 = vmatpush1.msra.mxu0 0.0
        %663 = vmatprep.subr.mxu0 0.0
        %664 = vmatpush1.msra.mxu0 0.0
        %665 = vmatprep.subr.mxu0 0.0
        %666 = vmatpush1.msra.mxu0 0.0
        %667 = vmatprep.subr.mxu0 0.0
        %668 = vmatpush1.msra.mxu0 0.0
        %669 = vmatprep.subr.mxu0 0.0
        %670 = vmatpush1.msra.mxu0 0.0
        %671 = vmatprep.subr.mxu0 0.0
        %672 = vmatpush1.msra.mxu0 0.0
        %673 = vmatprep.subr.mxu0 0.0
        %674 = vmatpush1.msra.mxu0 0.0
        %675 = vmatprep.subr.mxu0 0.0
        %676 = vmatpush1.msra.mxu0 0.0
        %677 = vmatprep.subr.mxu0 0.0
        %678 = vmatpush1.msra.mxu0 0.0
        %679 = vmatprep.subr.mxu0 0.0
        %680 = vmatpush1.msra.mxu0 0.0
        %681 = vmatprep.subr.mxu0 0.0
        %682 = vmatpush1.msra.mxu0 0.0
        %683 = vmatprep.subr.mxu0 0.0
        %684 = vmatpush1.msra.mxu0 0.0
        %685 = vmatprep.subr.mxu0 0.0
        %686 = vmatpush1.msra.mxu0 0.0
        %687 = vmatprep.subr.mxu0 0.0
        %688 = vmatpush1.msra.mxu0 0.0
        %689 = vmatprep.subr.mxu0 0.0
        %690 = vmatpush1.msra.mxu0 0.0
        %691 = vmatprep.subr.mxu0 0.0
        %692 = vmatpush1.msra.mxu0 0.0
        %693 = vmatprep.subr.mxu0 0.0
        %694 = vmatpush1.msra.mxu0 0.0
        %695 = vmatprep.subr.mxu0 0.0
        %696 = vmatpush1.msra.mxu0 0.0
        %697 = vmatprep.mubr.f32.mxu0 0.0
        %698 = vmatmul.mubr.f32.gmra.mrb[0].mxu0 %v631
        %v699 = vpop.f32.mrb[0].mxu0
        %v700 = vadd.f32 0.0, %v699
        %v701 = vpop.f32.mrb[0].mxu0
        %702 = vdwg.mxu0
        %v703 = vld [vmem:[#allocation5] sm:$0xff]
        %v704 = vld [vmem:[#allocation5 + $0x8] sm:$0xff]
        %v705 = vld [vmem:[#allocation5 + $0x10] sm:$0xff]
        %v706 = vld [vmem:[#allocation5 + $0x18] sm:$0xff]
        %v707 = vcombine.low %v589, %v590
        %v708 = vcombine.low %v591, %v592
        %v709 = vcombine.low %v593, %v594
        %v710 = vcombine.low %v595, %v596
        %v711 = vsel %vm630, %v707, 0
        %v713 = vsel %vm630, %v708, 0
        %v715 = vsel %vm630, %v709, 0
        %v717 = vsel %vm630, %v710, 0
        %719 = vmatprep.subr.mxu0 0.0
        %720 = vmatpush1.msra.mxu0 %v703
        %721 = vmatprep.subr.mxu0 0.0
        %722 = vmatpush1.msra.mxu0 %v704
        %723 = vmatprep.subr.mxu0 0.0
        %724 = vmatpush1.msra.mxu0 %v705
        %725 = vmatprep.subr.mxu0 0.0
        %726 = vmatpush1.msra.mxu0 %v706
        %727 = vmatprep.subr.mxu0 0.0
        %728 = vmatpush1.msra.mxu0 0.0
        %729 = vmatprep.subr.mxu0 0.0
        %730 = vmatpush1.msra.mxu0 0.0
        %731 = vmatprep.subr.mxu0 0.0
        %732 = vmatpush1.msra.mxu0 0.0
        %733 = vmatprep.subr.mxu0 0.0
        %734 = vmatpush1.msra.mxu0 0.0
        %735 = vmatprep.subr.mxu0 0.0
        %736 = vmatpush1.msra.mxu0 0.0
        %737 = vmatprep.subr.mxu0 0.0
        %738 = vmatpush1.msra.mxu0 0.0
        %739 = vmatprep.subr.mxu0 0.0
        %740 = vmatpush1.msra.mxu0 0.0
        %741 = vmatprep.subr.mxu0 0.0
        %742 = vmatpush1.msra.mxu0 0.0
        %743 = vmatprep.subr.mxu0 0.0
        %744 = vmatpush1.msra.mxu0 0.0
        %745 = vmatprep.subr.mxu0 0.0
        %746 = vmatpush1.msra.mxu0 0.0
        %747 = vmatprep.subr.mxu0 0.0
        %748 = vmatpush1.msra.mxu0 0.0
        %749 = vmatprep.subr.mxu0 0.0
        %750 = vmatpush1.msra.mxu0 0.0
        %751 = vmatprep.subr.mxu0 0.0
        %752 = vmatpush1.msra.mxu0 0.0
        %753 = vmatprep.subr.mxu0 0.0
        %754 = vmatpush1.msra.mxu0 0.0
        %755 = vmatprep.subr.mxu0 0.0
        %756 = vmatpush1.msra.mxu0 0.0
        %757 = vmatprep.subr.mxu0 0.0
        %758 = vmatpush1.msra.mxu0 0.0
        %759 = vmatprep.subr.mxu0 0.0
        %760 = vmatpush1.msra.mxu0 0.0
        %761 = vmatprep.subr.mxu0 0.0
        %762 = vmatpush1.msra.mxu0 0.0
        %763 = vmatprep.subr.mxu0 0.0
        %764 = vmatpush1.msra.mxu0 0.0
        %765 = vmatprep.subr.mxu0 0.0
        %766 = vmatpush1.msra.mxu0 0.0
        %767 = vmatprep.subr.mxu0 0.0
        %768 = vmatpush1.msra.mxu0 0.0
        %769 = vmatprep.subr.mxu0 0.0
        %770 = vmatpush1.msra.mxu0 0.0
        %771 = vmatprep.subr.mxu0 0.0
        %772 = vmatpush1.msra.mxu0 0.0
        %773 = vmatprep.subr.mxu0 0.0
        %774 = vmatpush1.msra.mxu0 0.0
        %775 = vmatprep.subr.mxu0 0.0
        %776 = vmatpush1.msra.mxu0 0.0
        %777 = vmatprep.subr.mxu0 0.0
        %778 = vmatpush1.msra.mxu0 0.0
        %779 = vmatprep.subr.mxu0 0.0
        %780 = vmatpush1.msra.mxu0 0.0
        %781 = vmatprep.subr.mxu0 0.0
        %782 = vmatpush1.msra.mxu0 0.0
        %783 = vmatprep.mubr.f32.mxu0 0.0
        %784 = vmatmul.mubr.f32.gmra.mrb[0].mxu0 %v711
        %v785 = vpop.f32.mrb[0].mxu0
        %v786 = vadd.f32 0.0, %v785
        %v787 = vpop.f32.mrb[0].mxu0
        %788 = vmatprep.mubr.f32.mxu0 0.0
        %789 = vmatmul.mubr.f32.gmra.mrb[0].mxu0 %v713
        %v790 = vpop.f32.mrb[0].mxu0
        %v791 = vadd.f32 0.0, %v790
        %v792 = vpop.f32.mrb[0].mxu0
        %793 = vmatprep.mubr.f32.mxu0 0.0
        %794 = vmatmul.mubr.f32.gmra.mrb[0].mxu0 %v715
        %v795 = vpop.f32.mrb[0].mxu0
        %v796 = vadd.f32 0.0, %v795
        %v797 = vpop.f32.mrb[0].mxu0
        %798 = vmatprep.mubr.f32.mxu0 0.0
        %799 = vmatmul.mubr.f32.gmra.mrb[0].mxu0 %v717
        %v800 = vpop.f32.mrb[0].mxu0
        %v801 = vadd.f32 0.0, %v800
        %v802 = vpop.f32.mrb[0].mxu0
        %803 = vdwg.mxu0
        %v804 = vld [vmem:[#allocation7] sm:$0xff]
        %v805 = vld [vmem:[#allocation7 + $0x8] sm:$0xff]
        %v806 = vld [vmem:[#allocation7 + $0x10] sm:$0xff]
        %v807 = vld [vmem:[#allocation7 + $0x18] sm:$0xff]
        %808 = vmatprep.subr.mxu0 0.0
        %809 = vmatpush1.msra.mxu0 %v804
        %810 = vmatprep.subr.mxu0 0.0
        %811 = vmatpush1.msra.mxu0 %v805
        %812 = vmatprep.subr.mxu0 0.0
        %813 = vmatpush1.msra.mxu0 %v806
        %814 = vmatprep.subr.mxu0 0.0
        %815 = vmatpush1.msra.mxu0 %v807
        %816 = vmatprep.subr.mxu0 0.0
        %817 = vmatpush1.msra.mxu0 0.0
        %818 = vmatprep.subr.mxu0 0.0
        %819 = vmatpush1.msra.mxu0 0.0
        %820 = vmatprep.subr.mxu0 0.0
        %821 = vmatpush1.msra.mxu0 0.0
        %822 = vmatprep.subr.mxu0 0.0
        %823 = vmatpush1.msra.mxu0 0.0
        %824 = vmatprep.subr.mxu0 0.0
        %825 = vmatpush1.msra.mxu0 0.0
        %826 = vmatprep.subr.mxu0 0.0
        %827 = vmatpush1.msra.mxu0 0.0
        %828 = vmatprep.subr.mxu0 0.0
        %829 = vmatpush1.msra.mxu0 0.0
        %830 = vmatprep.subr.mxu0 0.0
        %831 = vmatpush1.msra.mxu0 0.0
        %832 = vmatprep.subr.mxu0 0.0
        %833 = vmatpush1.msra.mxu0 0.0
        %834 = vmatprep.subr.mxu0 0.0
        %835 = vmatpush1.msra.mxu0 0.0
        %836 = vmatprep.subr.mxu0 0.0
        %837 = vmatpush1.msra.mxu0 0.0
        %838 = vmatprep.subr.mxu0 0.0
        %839 = vmatpush1.msra.mxu0 0.0
        %840 = vmatprep.subr.mxu0 0.0
        %841 = vmatpush1.msra.mxu0 0.0
        %842 = vmatprep.subr.mxu0 0.0
        %843 = vmatpush1.msra.mxu0 0.0
        %844 = vmatprep.subr.mxu0 0.0
        %845 = vmatpush1.msra.mxu0 0.0
        %846 = vmatprep.subr.mxu0 0.0
        %847 = vmatpush1.msra.mxu0 0.0
        %848 = vmatprep.subr.mxu0 0.0
        %849 = vmatpush1.msra.mxu0 0.0
        %850 = vmatprep.subr.mxu0 0.0
        %851 = vmatpush1.msra.mxu0 0.0
        %852 = vmatprep.subr.mxu0 0.0
        %853 = vmatpush1.msra.mxu0 0.0
        %854 = vmatprep.subr.mxu0 0.0
        %855 = vmatpush1.msra.mxu0 0.0
        %856 = vmatprep.subr.mxu0 0.0
        %857 = vmatpush1.msra.mxu0 0.0
        %858 = vmatprep.subr.mxu0 0.0
        %859 = vmatpush1.msra.mxu0 0.0
        %860 = vmatprep.subr.mxu0 0.0
        %861 = vmatpush1.msra.mxu0 0.0
        %862 = vmatprep.subr.mxu0 0.0
        %863 = vmatpush1.msra.mxu0 0.0
        %864 = vmatprep.subr.mxu0 0.0
        %865 = vmatpush1.msra.mxu0 0.0
        %866 = vmatprep.subr.mxu0 0.0
        %867 = vmatpush1.msra.mxu0 0.0
        %868 = vmatprep.subr.mxu0 0.0
        %869 = vmatpush1.msra.mxu0 0.0
        %870 = vmatprep.subr.mxu0 0.0
        %871 = vmatpush1.msra.mxu0 0.0
        %872 = vmatprep.mubr.f32.mxu0 0.0
        %873 = vmatmul.mubr.f32.gmra.mrb[0].mxu0 %v711
        %v874 = vpop.f32.mrb[0].mxu0
        %v875 = vadd.f32 0.0, %v874
        %v876 = vpop.f32.mrb[0].mxu0
        %877 = vmatprep.mubr.f32.mxu0 0.0
        %878 = vmatmul.mubr.f32.gmra.mrb[0].mxu0 %v713
        %v879 = vpop.f32.mrb[0].mxu0
        %v880 = vadd.f32 0.0, %v879
        %v881 = vpop.f32.mrb[0].mxu0
        %882 = vmatprep.mubr.f32.mxu0 0.0
        %883 = vmatmul.mubr.f32.gmra.mrb[0].mxu0 %v715
        %v884 = vpop.f32.mrb[0].mxu0
        %v885 = vadd.f32 0.0, %v884
        %v886 = vpop.f32.mrb[0].mxu0
        %887 = vmatprep.mubr.f32.mxu0 0.0
        %888 = vmatmul.mubr.f32.gmra.mrb[0].mxu0 %v717
        %v889 = vpop.f32.mrb[0].mxu0
        %v890 = vadd.f32 0.0, %v889
        %v891 = vpop.f32.mrb[0].mxu0
        %892 = vdwg.mxu0
        %v897 = vcombine.high %v786, %v786
        %v898 = vcombine.high %v791, %v791
        %v899 = vcombine.high %v796, %v796
        %v900 = vcombine.high %v801, %v801
        %v905 = vld [vmem:[%s452] sm:$0xff]
        %vm906 = vcmp.ne.f32.partialorder %v905, 0.0
        %v907 = vsel %vm906, 1, 0
        %v908 = vcvt.s32.f32 %v907
        %v909 = vlaneseq
        %v910 = vshrl.u32 %v909, 7
        %v911 = vsub.s32 0, %v910
        %v912 = vrot.slane %v908, %v911
        %914 = vbcast.lane.b32.xlu0 %v912, 256
        %v915 = vpop.permute.xlu0 %914
        %v916 = vlaneseq
        %v917 = vshrl.u32 %v916, 7
        %v918 = vsub.s32 1, %v917
        %v919 = vrot.slane %v908, %v918
        %921 = vbcast.lane.b32.xlu0 %v919, 256
        %v922 = vpop.permute.xlu0 %921
        %v923 = vlaneseq
        %v924 = vshrl.u32 %v923, 7
        %v925 = vsub.s32 2, %v924
        %v926 = vrot.slane %v908, %v925
        %928 = vbcast.lane.b32.xlu0 %v926, 256
        %v929 = vpop.permute.xlu0 %928
        %v930 = vlaneseq
        %v931 = vshrl.u32 %v930, 7
        %v932 = vsub.s32 3, %v931
        %v933 = vrot.slane %v908, %v932
        %935 = vbcast.lane.b32.xlu0 %v933, 256
        %v936 = vpop.permute.xlu0 %935
        %v937 = vlaneseq
        %v938 = vshrl.u32 %v937, 7
        %v939 = vsub.s32 4, %v938
        %v940 = vrot.slane %v908, %v939
        %942 = vbcast.lane.b32.xlu0 %v940, 256
        %v943 = vpop.permute.xlu0 %942
        %v944 = vlaneseq
        %v945 = vshrl.u32 %v944, 7
        %v946 = vsub.s32 5, %v945
        %v947 = vrot.slane %v908, %v946
        %949 = vbcast.lane.b32.xlu0 %v947, 256
        %v950 = vpop.permute.xlu0 %949
        %v951 = vlaneseq
        %v952 = vshrl.u32 %v951, 7
        %v953 = vsub.s32 6, %v952
        %v954 = vrot.slane %v908, %v953
        %956 = vbcast.lane.b32.xlu0 %v954, 256
        %v957 = vpop.permute.xlu0 %956
        %v958 = vlaneseq
        %v959 = vshrl.u32 %v958, 7
        %v960 = vsub.s32 7, %v959
        %v961 = vrot.slane %v908, %v960
        %963 = vbcast.lane.b32.xlu0 %v961, 256
        %v964 = vpop.permute.xlu0 %963
        %vm965 = vcmask 31744
        %v966 = vsel %vm965, %v905, 0.0
        %967 = vadd.xlane.f32.xlu0 %v966
        %v968 = vpop.xlane.xlu0 %967
        %v969 = vmul.f32 %v786, %v915
        %v970 = vmul.f32 %v897, %v922
        %v971 = vmul.f32 %v791, %v929
        %v972 = vmul.f32 %v898, %v936
        %v973 = vmul.f32 %v796, %v943
        %v974 = vmul.f32 %v899, %v950
        %v975 = vmul.f32 %v801, %v957
        %v976 = vmul.f32 %v900, %v964
        %v977 = vsel %vm461, %v969, 0.0
        %v978 = vrot.slane %v977, 4
        %v979 = vadd.f32 %v977, %v978
        %v980 = vrot.slane %v979, 2
        %v981 = vadd.f32 %v979, %v980
        %v982 = vrot.slane %v981, 1
        %v983 = vadd.f32 %v981, %v982
        %v984 = vsel %vm461, %v970, 0.0
        %v985 = vrot.slane %v984, 4
        %v986 = vadd.f32 %v984, %v985
        %v987 = vrot.slane %v986, 2
        %v988 = vadd.f32 %v986, %v987
        %v989 = vrot.slane %v988, 1
        %v990 = vadd.f32 %v988, %v989
        %v991 = vsel %vm461, %v971, 0.0
        %v992 = vrot.slane %v991, 4
        %v993 = vadd.f32 %v991, %v992
        %v994 = vrot.slane %v993, 2
        %v995 = vadd.f32 %v993, %v994
        %v996 = vrot.slane %v995, 1
        %v997 = vadd.f32 %v995, %v996
        %v998 = vsel %vm461, %v972, 0.0
        %v999 = vrot.slane %v998, 4
        %v1000 = vadd.f32 %v998, %v999
        %v1001 = vrot.slane %v1000, 2
        %v1002 = vadd.f32 %v1000, %v1001
        %v1003 = vrot.slane %v1002, 1
        %v1004 = vadd.f32 %v1002, %v1003
        %v1005 = vsel %vm461, %v973, 0.0
        %v1006 = vrot.slane %v1005, 4
        %v1007 = vadd.f32 %v1005, %v1006
        %v1008 = vrot.slane %v1007, 2
        %v1009 = vadd.f32 %v1007, %v1008
        %v1010 = vrot.slane %v1009, 1
        %v1011 = vadd.f32 %v1009, %v1010
        %v1012 = vsel %vm461, %v974, 0.0
        %v1013 = vrot.slane %v1012, 4
        %v1014 = vadd.f32 %v1012, %v1013
        %v1015 = vrot.slane %v1014, 2
        %v1016 = vadd.f32 %v1014, %v1015
        %v1017 = vrot.slane %v1016, 1
        %v1018 = vadd.f32 %v1016, %v1017
        %v1019 = vsel %vm461, %v975, 0.0
        %v1020 = vrot.slane %v1019, 4
        %v1021 = vadd.f32 %v1019, %v1020
        %v1022 = vrot.slane %v1021, 2
        %v1023 = vadd.f32 %v1021, %v1022
        %v1024 = vrot.slane %v1023, 1
        %v1025 = vadd.f32 %v1023, %v1024
        %v1026 = vsel %vm461, %v976, 0.0
        %v1027 = vrot.slane %v1026, 4
        %v1028 = vadd.f32 %v1026, %v1027
        %v1029 = vrot.slane %v1028, 2
        %v1030 = vadd.f32 %v1028, %v1029
        %v1031 = vrot.slane %v1030, 1
        %v1032 = vadd.f32 %v1030, %v1031
        %v1033 = vrcp.pop %v968
        %v1035 = vrot.slane %v1033, 1
        %v1036 = vrot.slane %v1033, 2
        %v1037 = vrot.slane %v1033, 3
        %v1038 = vrot.slane %v1033, 4
        %v1039 = vrot.slane %v1033, 5
        %v1040 = vrot.slane %v1033, 6
        %v1041 = vrot.slane %v1033, 7
        %v1050 = vmul.f32 %v983, %v1033
        %v1051 = vmul.f32 %v990, %v1035
        %v1052 = vmul.f32 %v997, %v1036
        %v1053 = vmul.f32 %v1004, %v1037
        %v1054 = vmul.f32 %v1011, %v1038
        %v1055 = vmul.f32 %v1018, %v1039
        %v1056 = vmul.f32 %v1025, %v1040
        %v1057 = vmul.f32 %v1032, %v1041
        %v1059 = vcombine.high %v700, %v700
        %v1061 = vunpack.c.l.s4 1966171168
        %v1062 = vunpack.c.0.s8 %v1061
        %v1063 = vlaneseq
        %v1064 = vshrl.u32 %v1063, 7
        %v1065 = vsub.s32 %v1062, %v1064
        %v1066 = vrot.slane %v700, %v1065
        %v1068 = vunpack.c.l.s4 1966171168
        %v1069 = vunpack.c.0.s8 %v1068
        %v1070 = vlaneseq
        %v1071 = vshrl.u32 %v1070, 7
        %v1072 = vsub.s32 %v1069, %v1071
        %v1073 = vrot.slane %v1059, %v1072
        %v1074 = vcombine.high %v1066, %v1066
        %v1075 = vcombine.high %v1073, %v1073
        %v1077 = vunpack.c.l.s4 1966171168
        %v1078 = vunpack.c.0.s8 %v1077
        %v1079 = vlaneseq
        %v1080 = vshrl.u32 %v1079, 7
        %v1081 = vsub.s32 %v1078, %v1080
        %v1082 = vrot.slane %v1066, %v1081
        %v1084 = vunpack.c.l.s4 1966171168
        %v1085 = vunpack.c.0.s8 %v1084
        %v1086 = vlaneseq
        %v1087 = vshrl.u32 %v1086, 7
        %v1088 = vsub.s32 %v1085, %v1087
        %v1089 = vrot.slane %v1073, %v1088
        %v1091 = vunpack.c.l.s4 1966171168
        %v1092 = vunpack.c.0.s8 %v1091
        %v1093 = vlaneseq
        %v1094 = vshrl.u32 %v1093, 7
        %v1095 = vsub.s32 %v1092, %v1094
        %v1096 = vrot.slane %v1074, %v1095
        %v1098 = vunpack.c.l.s4 1966171168
        %v1099 = vunpack.c.0.s8 %v1098
        %v1100 = vlaneseq
        %v1101 = vshrl.u32 %v1100, 7
        %v1102 = vsub.s32 %v1099, %v1101
        %v1103 = vrot.slane %v1075, %v1102
        %v1104 = vcombine.high %v1082, %v1082
        %v1105 = vcombine.high %v1089, %v1089
        %v1106 = vcombine.high %v1096, %v1096
        %v1107 = vcombine.high %v1103, %v1103
        %v1108 = vlaneseq
        %v1109 = vshrl.u32 %v1108, 7
        %v1110 = vsub.s32 0, %v1109
        %v1111 = vrot.slane %v1082, %v1110
        %v1112 = vlaneseq
        %v1113 = vshrl.u32 %v1112, 7
        %v1114 = vsub.s32 0, %v1113
        %v1115 = vrot.slane %v1096, %v1114
        %v1116 = vlaneseq
        %v1117 = vshrl.u32 %v1116, 7
        %v1118 = vsub.s32 0, %v1117
        %v1119 = vrot.slane %v1104, %v1118
        %v1120 = vlaneseq
        %v1121 = vshrl.u32 %v1120, 7
        %v1122 = vsub.s32 0, %v1121
        %v1123 = vrot.slane %v1106, %v1122
        %v1124 = vlaneseq
        %v1125 = vshrl.u32 %v1124, 7
        %v1126 = vsub.s32 0, %v1125
        %v1127 = vrot.slane %v1089, %v1126
        %v1128 = vlaneseq
        %v1129 = vshrl.u32 %v1128, 7
        %v1130 = vsub.s32 0, %v1129
        %v1131 = vrot.slane %v1103, %v1130
        %v1132 = vlaneseq
        %v1133 = vshrl.u32 %v1132, 7
        %v1134 = vsub.s32 0, %v1133
        %v1135 = vrot.slane %v1105, %v1134
        %v1136 = vlaneseq
        %v1137 = vshrl.u32 %v1136, 7
        %v1138 = vsub.s32 0, %v1137
        %v1139 = vrot.slane %v1107, %v1138
        %v1156 = vrot.slane %v1051, 7
        %v1157 = vsel %vm610, %v1156, %v1050
        %v1158 = vrot.slane %v1052, 6
        %v1159 = vsel %vm613, %v1158, %v1157
        %v1160 = vrot.slane %v1053, 5
        %v1161 = vsel %vm616, %v1160, %v1159
        %v1162 = vrot.slane %v1054, 4
        %v1163 = vsel %vm619, %v1162, %v1161
        %v1164 = vrot.slane %v1055, 3
        %v1165 = vsel %vm622, %v1164, %v1163
        %v1166 = vrot.slane %v1056, 2
        %v1167 = vsel %vm625, %v1166, %v1165
        %v1168 = vrot.slane %v1057, 1
        %v1169 = vsel %vm628, %v1168, %v1167
        %v1171 = vmul.f32 %v1111, %v1169
        %v1172 = vmul.f32 %v1115, %v1169
        %v1173 = vmul.f32 %v1119, %v1169
        %v1174 = vmul.f32 %v1123, %v1169
        %v1175 = vmul.f32 %v1127, %v1169
        %v1176 = vmul.f32 %v1131, %v1169
        %v1177 = vmul.f32 %v1135, %v1169
        %v1178 = vmul.f32 %v1139, %v1169
        %v1179 = vld [vmem:[#allocation10] sm:$0xff]
        %v1180 = vld [vmem:[#allocation10 + $0x8] sm:$0xff]
        %v1181 = vld [vmem:[#allocation10 + $0x10] sm:$0xff]
        %v1182 = vld [vmem:[#allocation10 + $0x18] sm:$0xff]
        %v1184 = vsel %vm630, %v1171, 0
        %v1187 = vsel %vm630, %v1172, 0
        %v1190 = vsel %vm630, %v1173, 0
        %v1193 = vsel %vm630, %v1174, 0
        %v1196 = vsel %vm630, %v1175, 0
        %v1199 = vsel %vm630, %v1176, 0
        %v1202 = vsel %vm630, %v1177, 0
        %v1205 = vsel %vm630, %v1178, 0
        %1207 = vmatprep.subr.mxu0 0.0
        %1208 = vmatpush1.msra.mxu0 %v1179
        %1209 = vmatprep.subr.mxu0 0.0
        %1210 = vmatpush1.msra.mxu0 %v1180
        %1211 = vmatprep.subr.mxu0 0.0
        %1212 = vmatpush1.msra.mxu0 %v1181
        %1213 = vmatprep.subr.mxu0 0.0
        %1214 = vmatpush1.msra.mxu0 %v1182
        %1215 = vmatprep.subr.mxu0 0.0
        %1216 = vmatpush1.msra.mxu0 0.0
        %1217 = vmatprep.subr.mxu0 0.0
        %1218 = vmatpush1.msra.mxu0 0.0
        %1219 = vmatprep.subr.mxu0 0.0
        %1220 = vmatpush1.msra.mxu0 0.0
        %1221 = vmatprep.subr.mxu0 0.0
        %1222 = vmatpush1.msra.mxu0 0.0
        %1223 = vmatprep.subr.mxu0 0.0
        %1224 = vmatpush1.msra.mxu0 0.0
        %1225 = vmatprep.subr.mxu0 0.0
        %1226 = vmatpush1.msra.mxu0 0.0
        %1227 = vmatprep.subr.mxu0 0.0
        %1228 = vmatpush1.msra.mxu0 0.0
        %1229 = vmatprep.subr.mxu0 0.0
        %1230 = vmatpush1.msra.mxu0 0.0
        %1231 = vmatprep.subr.mxu0 0.0
        %1232 = vmatpush1.msra.mxu0 0.0
        %1233 = vmatprep.subr.mxu0 0.0
        %1234 = vmatpush1.msra.mxu0 0.0
        %1235 = vmatprep.subr.mxu0 0.0
        %1236 = vmatpush1.msra.mxu0 0.0
        %1237 = vmatprep.subr.mxu0 0.0
        %1238 = vmatpush1.msra.mxu0 0.0
        %1239 = vmatprep.subr.mxu0 0.0
        %1240 = vmatpush1.msra.mxu0 0.0
        %1241 = vmatprep.subr.mxu0 0.0
        %1242 = vmatpush1.msra.mxu0 0.0
        %1243 = vmatprep.subr.mxu0 0.0
        %1244 = vmatpush1.msra.mxu0 0.0
        %1245 = vmatprep.subr.mxu0 0.0
        %1246 = vmatpush1.msra.mxu0 0.0
        %1247 = vmatprep.subr.mxu0 0.0
        %1248 = vmatpush1.msra.mxu0 0.0
        %1249 = vmatprep.subr.mxu0 0.0
        %1250 = vmatpush1.msra.mxu0 0.0
        %1251 = vmatprep.subr.mxu0 0.0
        %1252 = vmatpush1.msra.mxu0 0.0
        %1253 = vmatprep.subr.mxu0 0.0
        %1254 = vmatpush1.msra.mxu0 0.0
        %1255 = vmatprep.subr.mxu0 0.0
        %1256 = vmatpush1.msra.mxu0 0.0
        %1257 = vmatprep.subr.mxu0 0.0
        %1258 = vmatpush1.msra.mxu0 0.0
        %1259 = vmatprep.subr.mxu0 0.0
        %1260 = vmatpush1.msra.mxu0 0.0
        %1261 = vmatprep.subr.mxu0 0.0
        %1262 = vmatpush1.msra.mxu0 0.0
        %1263 = vmatprep.subr.mxu0 0.0
        %1264 = vmatpush1.msra.mxu0 0.0
        %1265 = vmatprep.subr.mxu0 0.0
        %1266 = vmatpush1.msra.mxu0 0.0
        %1267 = vmatprep.subr.mxu0 0.0
        %1268 = vmatpush1.msra.mxu0 0.0
        %1269 = vmatprep.subr.mxu0 0.0
        %1270 = vmatpush1.msra.mxu0 0.0
        %1271 = vmatprep.mubr.f32.mxu0 0.0
        %1272 = vmatmul.mubr.f32.gmra.mrb[0].mxu0 %v1184
        %v1273 = vpop.f32.mrb[0].mxu0
        %v1274 = vadd.f32 0.0, %v1273
        %v1275 = vpop.f32.mrb[0].mxu0
        %1276 = vmatprep.mubr.f32.mxu0 0.0
        %1277 = vmatmul.mubr.f32.gmra.mrb[0].mxu0 %v1187
        %v1278 = vpop.f32.mrb[0].mxu0
        %v1279 = vadd.f32 0.0, %v1278
        %v1280 = vpop.f32.mrb[0].mxu0
        %1281 = vmatprep.mubr.f32.mxu0 0.0
        %1282 = vmatmul.mubr.f32.gmra.mrb[0].mxu0 %v1190
        %v1283 = vpop.f32.mrb[0].mxu0
        %v1284 = vadd.f32 0.0, %v1283
        %v1285 = vpop.f32.mrb[0].mxu0
        %1286 = vmatprep.mubr.f32.mxu0 0.0
        %1287 = vmatmul.mubr.f32.gmra.mrb[0].mxu0 %v1193
        %v1288 = vpop.f32.mrb[0].mxu0
        %v1289 = vadd.f32 0.0, %v1288
        %v1290 = vpop.f32.mrb[0].mxu0
        %1291 = vmatprep.mubr.f32.mxu0 0.0
        %1292 = vmatmul.mubr.f32.gmra.mrb[0].mxu0 %v1196
        %v1293 = vpop.f32.mrb[0].mxu0
        %v1294 = vadd.f32 0.0, %v1293
        %v1295 = vpop.f32.mrb[0].mxu0
        %1296 = vmatprep.mubr.f32.mxu0 0.0
        %1297 = vmatmul.mubr.f32.gmra.mrb[0].mxu0 %v1199
        %v1298 = vpop.f32.mrb[0].mxu0
        %v1299 = vadd.f32 0.0, %v1298
        %v1300 = vpop.f32.mrb[0].mxu0
        %1301 = vmatprep.mubr.f32.mxu0 0.0
        %1302 = vmatmul.mubr.f32.gmra.mrb[0].mxu0 %v1202
        %v1303 = vpop.f32.mrb[0].mxu0
        %v1304 = vadd.f32 0.0, %v1303
        %v1305 = vpop.f32.mrb[0].mxu0
        %1306 = vmatprep.mubr.f32.mxu0 0.0
        %1307 = vmatmul.mubr.f32.gmra.mrb[0].mxu0 %v1205
        %v1308 = vpop.f32.mrb[0].mxu0
        %v1309 = vadd.f32 0.0, %v1308
        %v1310 = vpop.f32.mrb[0].mxu0
        %1311 = vdwg.mxu0
        %v1312 = vmul.f32 %v1274, 0.35355338
        %v1313 = vmul.f32 %v1279, 0.35355338
        %v1314 = vmul.f32 %v1284, 0.35355338
        %v1315 = vmul.f32 %v1289, 0.35355338
        %v1316 = vmul.f32 %v1294, 0.35355338
        %v1317 = vmul.f32 %v1299, 0.35355338
        %v1318 = vmul.f32 %v1304, 0.35355338
        %v1319 = vmul.f32 %v1309, 0.35355338
        %v1320 = vsel %vm630, %v1312, -inf
        %v1321 = vrot.slane %v1320, 4
        %v1322 = vmax.f32 %v1320, %v1321
        %v1323 = vrot.slane %v1322, 2
        %v1324 = vmax.f32 %v1322, %v1323
        %v1325 = vrot.slane %v1324, 1
        %v1326 = vmax.f32 %v1324, %v1325
        %v1327 = vsel %vm630, %v1313, -inf
        %v1328 = vrot.slane %v1327, 4
        %v1329 = vmax.f32 %v1327, %v1328
        %v1330 = vrot.slane %v1329, 2
        %v1331 = vmax.f32 %v1329, %v1330
        %v1332 = vrot.slane %v1331, 1
        %v1333 = vmax.f32 %v1331, %v1332
        %v1334 = vsel %vm630, %v1314, -inf
        %v1335 = vrot.slane %v1334, 4
        %v1336 = vmax.f32 %v1334, %v1335
        %v1337 = vrot.slane %v1336, 2
        %v1338 = vmax.f32 %v1336, %v1337
        %v1339 = vrot.slane %v1338, 1
        %v1340 = vmax.f32 %v1338, %v1339
        %v1341 = vsel %vm630, %v1315, -inf
        %v1342 = vrot.slane %v1341, 4
        %v1343 = vmax.f32 %v1341, %v1342
        %v1344 = vrot.slane %v1343, 2
        %v1345 = vmax.f32 %v1343, %v1344
        %v1346 = vrot.slane %v1345, 1
        %v1347 = vmax.f32 %v1345, %v1346
        %v1348 = vsel %vm630, %v1316, -inf
        %v1349 = vrot.slane %v1348, 4
        %v1350 = vmax.f32 %v1348, %v1349
        %v1351 = vrot.slane %v1350, 2
        %v1352 = vmax.f32 %v1350, %v1351
        %v1353 = vrot.slane %v1352, 1
        %v1354 = vmax.f32 %v1352, %v1353
        %v1355 = vsel %vm630, %v1317, -inf
        %v1356 = vrot.slane %v1355, 4
        %v1357 = vmax.f32 %v1355, %v1356
        %v1358 = vrot.slane %v1357, 2
        %v1359 = vmax.f32 %v1357, %v1358
        %v1360 = vrot.slane %v1359, 1
        %v1361 = vmax.f32 %v1359, %v1360
        %v1362 = vsel %vm630, %v1318, -inf
        %v1363 = vrot.slane %v1362, 4
        %v1364 = vmax.f32 %v1362, %v1363
        %v1365 = vrot.slane %v1364, 2
        %v1366 = vmax.f32 %v1364, %v1365
        %v1367 = vrot.slane %v1366, 1
        %v1368 = vmax.f32 %v1366, %v1367
        %v1369 = vsel %vm630, %v1319, -inf
        %v1370 = vrot.slane %v1369, 4
        %v1371 = vmax.f32 %v1369, %v1370
        %v1372 = vrot.slane %v1371, 2
        %v1373 = vmax.f32 %v1371, %v1372
        %v1374 = vrot.slane %v1373, 1
        %v1375 = vmax.f32 %v1373, %v1374
        %v1376 = vsub.f32 %v1312, %v1326
        %v1377 = vsub.f32 %v1313, %v1333
        %v1378 = vsub.f32 %v1314, %v1340
        %v1379 = vsub.f32 %v1315, %v1347
        %v1380 = vsub.f32 %v1316, %v1354
        %v1381 = vsub.f32 %v1317, %v1361
        %v1382 = vsub.f32 %v1318, %v1368
        %v1383 = vsub.f32 %v1319, %v1375
        %v1384 = vmul.f32 %v1376, 1.442695
        %v1385 = vpow.pop %v1384
        %v1386 = vmul.f32 %v1377, 1.442695
        %v1387 = vpow.pop %v1386
        %v1388 = vmul.f32 %v1378, 1.442695
        %v1389 = vpow.pop %v1388
        %v1390 = vmul.f32 %v1379, 1.442695
        %v1391 = vpow.pop %v1390
        %v1392 = vmul.f32 %v1380, 1.442695
        %v1393 = vpow.pop %v1392
        %v1394 = vmul.f32 %v1381, 1.442695
        %v1395 = vpow.pop %v1394
        %v1396 = vmul.f32 %v1382, 1.442695
        %v1397 = vpow.pop %v1396
        %v1398 = vmul.f32 %v1383, 1.442695
        %v1399 = vpow.pop %v1398
        %v1400 = vsel %vm630, %v1385, 0.0
        %v1401 = vrot.slane %v1400, 4
        %v1402 = vadd.f32 %v1400, %v1401
        %v1403 = vrot.slane %v1402, 2
        %v1404 = vadd.f32 %v1402, %v1403
        %v1405 = vrot.slane %v1404, 1
        %v1406 = vadd.f32 %v1404, %v1405
        %v1407 = vsel %vm630, %v1387, 0.0
        %v1408 = vrot.slane %v1407, 4
        %v1409 = vadd.f32 %v1407, %v1408
        %v1410 = vrot.slane %v1409, 2
        %v1411 = vadd.f32 %v1409, %v1410
        %v1412 = vrot.slane %v1411, 1
        %v1413 = vadd.f32 %v1411, %v1412
        %v1414 = vsel %vm630, %v1389, 0.0
        %v1415 = vrot.slane %v1414, 4
        %v1416 = vadd.f32 %v1414, %v1415
        %v1417 = vrot.slane %v1416, 2
        %v1418 = vadd.f32 %v1416, %v1417
        %v1419 = vrot.slane %v1418, 1
        %v1420 = vadd.f32 %v1418, %v1419
        %v1421 = vsel %vm630, %v1391, 0.0
        %v1422 = vrot.slane %v1421, 4
        %v1423 = vadd.f32 %v1421, %v1422
        %v1424 = vrot.slane %v1423, 2
        %v1425 = vadd.f32 %v1423, %v1424
        %v1426 = vrot.slane %v1425, 1
        %v1427 = vadd.f32 %v1425, %v1426
        %v1428 = vsel %vm630, %v1393, 0.0
        %v1429 = vrot.slane %v1428, 4
        %v1430 = vadd.f32 %v1428, %v1429
        %v1431 = vrot.slane %v1430, 2
        %v1432 = vadd.f32 %v1430, %v1431
        %v1433 = vrot.slane %v1432, 1
        %v1434 = vadd.f32 %v1432, %v1433
        %v1435 = vsel %vm630, %v1395, 0.0
        %v1436 = vrot.slane %v1435, 4
        %v1437 = vadd.f32 %v1435, %v1436
        %v1438 = vrot.slane %v1437, 2
        %v1439 = vadd.f32 %v1437, %v1438
        %v1440 = vrot.slane %v1439, 1
        %v1441 = vadd.f32 %v1439, %v1440
        %v1442 = vsel %vm630, %v1397, 0.0
        %v1443 = vrot.slane %v1442, 4
        %v1444 = vadd.f32 %v1442, %v1443
        %v1445 = vrot.slane %v1444, 2
        %v1446 = vadd.f32 %v1444, %v1445
        %v1447 = vrot.slane %v1446, 1
        %v1448 = vadd.f32 %v1446, %v1447
        %v1449 = vsel %vm630, %v1399, 0.0
        %v1450 = vrot.slane %v1449, 4
        %v1451 = vadd.f32 %v1449, %v1450
        %v1452 = vrot.slane %v1451, 2
        %v1453 = vadd.f32 %v1451, %v1452
        %v1454 = vrot.slane %v1453, 1
        %v1455 = vadd.f32 %v1453, %v1454
        %v1456 = vrcp.pop %v1406
        %v1457 = vrcp.pop %v1413
        %v1458 = vrcp.pop %v1420
        %v1459 = vrcp.pop %v1427
        %v1460 = vrcp.pop %v1434
        %v1461 = vrcp.pop %v1441
        %v1462 = vrcp.pop %v1448
        %v1463 = vrcp.pop %v1455
        %v1464 = vmul.f32 %v1385, %v1456
        %v1465 = vmul.f32 %v1387, %v1457
        %v1466 = vmul.f32 %v1389, %v1458
        %v1467 = vmul.f32 %v1391, %v1459
        %v1468 = vmul.f32 %v1393, %v1460
        %v1469 = vmul.f32 %v1395, %v1461
        %v1470 = vmul.f32 %v1397, %v1462
        %v1471 = vmul.f32 %v1399, %v1463
        %v1480 = vcombine.high %v1464, %v1464
        %v1482 = vunpack.c.l.s4 1966171168
        %v1483 = vunpack.c.0.s8 %v1482
        %v1484 = vlaneseq
        %v1485 = vshrl.u32 %v1484, 7
        %v1486 = vsub.s32 %v1483, %v1485
        %v1487 = vrot.slane %v1464, %v1486
        %v1489 = vunpack.c.l.s4 1966171168
        %v1490 = vunpack.c.0.s8 %v1489
        %v1491 = vlaneseq
        %v1492 = vshrl.u32 %v1491, 7
        %v1493 = vsub.s32 %v1490, %v1492
        %v1494 = vrot.slane %v1480, %v1493
        %v1495 = vcombine.high %v1487, %v1487
        %v1496 = vcombine.high %v1494, %v1494
        %v1498 = vunpack.c.l.s4 1966171168
        %v1499 = vunpack.c.0.s8 %v1498
        %v1500 = vlaneseq
        %v1501 = vshrl.u32 %v1500, 7
        %v1502 = vsub.s32 %v1499, %v1501
        %v1503 = vrot.slane %v1487, %v1502
        %v1505 = vunpack.c.l.s4 1966171168
        %v1506 = vunpack.c.0.s8 %v1505
        %v1507 = vlaneseq
        %v1508 = vshrl.u32 %v1507, 7
        %v1509 = vsub.s32 %v1506, %v1508
        %v1510 = vrot.slane %v1494, %v1509
        %v1512 = vunpack.c.l.s4 1966171168
        %v1513 = vunpack.c.0.s8 %v1512
        %v1514 = vlaneseq
        %v1515 = vshrl.u32 %v1514, 7
        %v1516 = vsub.s32 %v1513, %v1515
        %v1517 = vrot.slane %v1495, %v1516
        %v1519 = vunpack.c.l.s4 1966171168
        %v1520 = vunpack.c.0.s8 %v1519
        %v1521 = vlaneseq
        %v1522 = vshrl.u32 %v1521, 7
        %v1523 = vsub.s32 %v1520, %v1522
        %v1524 = vrot.slane %v1496, %v1523
        %v1525 = vcombine.high %v1503, %v1503
        %v1526 = vcombine.high %v1510, %v1510
        %v1527 = vcombine.high %v1517, %v1517
        %v1528 = vcombine.high %v1524, %v1524
        %v1529 = vcombine.high %v1465, %v1465
        %v1531 = vunpack.c.l.s4 1966171168
        %v1532 = vunpack.c.0.s8 %v1531
        %v1533 = vlaneseq
        %v1534 = vshrl.u32 %v1533, 7
        %v1535 = vsub.s32 %v1532, %v1534
        %v1536 = vrot.slane %v1465, %v1535
        %v1538 = vunpack.c.l.s4 1966171168
        %v1539 = vunpack.c.0.s8 %v1538
        %v1540 = vlaneseq
        %v1541 = vshrl.u32 %v1540, 7
        %v1542 = vsub.s32 %v1539, %v1541
        %v1543 = vrot.slane %v1529, %v1542
        %v1544 = vcombine.high %v1536, %v1536
        %v1545 = vcombine.high %v1543, %v1543
        %v1547 = vunpack.c.l.s4 1966171168
        %v1548 = vunpack.c.0.s8 %v1547
        %v1549 = vlaneseq
        %v1550 = vshrl.u32 %v1549, 7
        %v1551 = vsub.s32 %v1548, %v1550
        %v1552 = vrot.slane %v1536, %v1551
        %v1554 = vunpack.c.l.s4 1966171168
        %v1555 = vunpack.c.0.s8 %v1554
        %v1556 = vlaneseq
        %v1557 = vshrl.u32 %v1556, 7
        %v1558 = vsub.s32 %v1555, %v1557
        %v1559 = vrot.slane %v1543, %v1558
        %v1561 = vunpack.c.l.s4 1966171168
        %v1562 = vunpack.c.0.s8 %v1561
        %v1563 = vlaneseq
        %v1564 = vshrl.u32 %v1563, 7
        %v1565 = vsub.s32 %v1562, %v1564
        %v1566 = vrot.slane %v1544, %v1565
        %v1568 = vunpack.c.l.s4 1966171168
        %v1569 = vunpack.c.0.s8 %v1568
        %v1570 = vlaneseq
        %v1571 = vshrl.u32 %v1570, 7
        %v1572 = vsub.s32 %v1569, %v1571
        %v1573 = vrot.slane %v1545, %v1572
        %v1574 = vcombine.high %v1552, %v1552
        %v1575 = vcombine.high %v1559, %v1559
        %v1576 = vcombine.high %v1566, %v1566
        %v1577 = vcombine.high %v1573, %v1573
        %v1578 = vcombine.high %v1466, %v1466
        %v1580 = vunpack.c.l.s4 1966171168
        %v1581 = vunpack.c.0.s8 %v1580
        %v1582 = vlaneseq
        %v1583 = vshrl.u32 %v1582, 7
        %v1584 = vsub.s32 %v1581, %v1583
        %v1585 = vrot.slane %v1466, %v1584
        %v1587 = vunpack.c.l.s4 1966171168
        %v1588 = vunpack.c.0.s8 %v1587
        %v1589 = vlaneseq
        %v1590 = vshrl.u32 %v1589, 7
        %v1591 = vsub.s32 %v1588, %v1590
        %v1592 = vrot.slane %v1578, %v1591
        %v1593 = vcombine.high %v1585, %v1585
        %v1594 = vcombine.high %v1592, %v1592
        %v1596 = vunpack.c.l.s4 1966171168
        %v1597 = vunpack.c.0.s8 %v1596
        %v1598 = vlaneseq
        %v1599 = vshrl.u32 %v1598, 7
        %v1600 = vsub.s32 %v1597, %v1599
        %v1601 = vrot.slane %v1585, %v1600
        %v1603 = vunpack.c.l.s4 1966171168
        %v1604 = vunpack.c.0.s8 %v1603
        %v1605 = vlaneseq
        %v1606 = vshrl.u32 %v1605, 7
        %v1607 = vsub.s32 %v1604, %v1606
        %v1608 = vrot.slane %v1592, %v1607
        %v1610 = vunpack.c.l.s4 1966171168
        %v1611 = vunpack.c.0.s8 %v1610
        %v1612 = vlaneseq
        %v1613 = vshrl.u32 %v1612, 7
        %v1614 = vsub.s32 %v1611, %v1613
        %v1615 = vrot.slane %v1593, %v1614
        %v1617 = vunpack.c.l.s4 1966171168
        %v1618 = vunpack.c.0.s8 %v1617
        %v1619 = vlaneseq
        %v1620 = vshrl.u32 %v1619, 7
        %v1621 = vsub.s32 %v1618, %v1620
        %v1622 = vrot.slane %v1594, %v1621
        %v1623 = vcombine.high %v1601, %v1601
        %v1624 = vcombine.high %v1608, %v1608
        %v1625 = vcombine.high %v1615, %v1615
        %v1626 = vcombine.high %v1622, %v1622
        %v1627 = vcombine.high %v1467, %v1467
        %v1629 = vunpack.c.l.s4 1966171168
        %v1630 = vunpack.c.0.s8 %v1629
        %v1631 = vlaneseq
        %v1632 = vshrl.u32 %v1631, 7
        %v1633 = vsub.s32 %v1630, %v1632
        %v1634 = vrot.slane %v1467, %v1633
        %v1636 = vunpack.c.l.s4 1966171168
        %v1637 = vunpack.c.0.s8 %v1636
        %v1638 = vlaneseq
        %v1639 = vshrl.u32 %v1638, 7
        %v1640 = vsub.s32 %v1637, %v1639
        %v1641 = vrot.slane %v1627, %v1640
        %v1642 = vcombine.high %v1634, %v1634
        %v1643 = vcombine.high %v1641, %v1641
        %v1645 = vunpack.c.l.s4 1966171168
        %v1646 = vunpack.c.0.s8 %v1645
        %v1647 = vlaneseq
        %v1648 = vshrl.u32 %v1647, 7
        %v1649 = vsub.s32 %v1646, %v1648
        %v1650 = vrot.slane %v1634, %v1649
        %v1652 = vunpack.c.l.s4 1966171168
        %v1653 = vunpack.c.0.s8 %v1652
        %v1654 = vlaneseq
        %v1655 = vshrl.u32 %v1654, 7
        %v1656 = vsub.s32 %v1653, %v1655
        %v1657 = vrot.slane %v1641, %v1656
        %v1659 = vunpack.c.l.s4 1966171168
        %v1660 = vunpack.c.0.s8 %v1659
        %v1661 = vlaneseq
        %v1662 = vshrl.u32 %v1661, 7
        %v1663 = vsub.s32 %v1660, %v1662
        %v1664 = vrot.slane %v1642, %v1663
        %v1666 = vunpack.c.l.s4 1966171168
        %v1667 = vunpack.c.0.s8 %v1666
        %v1668 = vlaneseq
        %v1669 = vshrl.u32 %v1668, 7
        %v1670 = vsub.s32 %v1667, %v1669
        %v1671 = vrot.slane %v1643, %v1670
        %v1672 = vcombine.high %v1650, %v1650
        %v1673 = vcombine.high %v1657, %v1657
        %v1674 = vcombine.high %v1664, %v1664
        %v1675 = vcombine.high %v1671, %v1671
        %v1676 = vcombine.high %v1468, %v1468
        %v1678 = vunpack.c.l.s4 1966171168
        %v1679 = vunpack.c.0.s8 %v1678
        %v1680 = vlaneseq
        %v1681 = vshrl.u32 %v1680, 7
        %v1682 = vsub.s32 %v1679, %v1681
        %v1683 = vrot.slane %v1468, %v1682
        %v1685 = vunpack.c.l.s4 1966171168
        %v1686 = vunpack.c.0.s8 %v1685
        %v1687 = vlaneseq
        %v1688 = vshrl.u32 %v1687, 7
        %v1689 = vsub.s32 %v1686, %v1688
        %v1690 = vrot.slane %v1676, %v1689
        %v1691 = vcombine.high %v1683, %v1683
        %v1692 = vcombine.high %v1690, %v1690
        %v1694 = vunpack.c.l.s4 1966171168
        %v1695 = vunpack.c.0.s8 %v1694
        %v1696 = vlaneseq
        %v1697 = vshrl.u32 %v1696, 7
        %v1698 = vsub.s32 %v1695, %v1697
        %v1699 = vrot.slane %v1683, %v1698
        %v1701 = vunpack.c.l.s4 1966171168
        %v1702 = vunpack.c.0.s8 %v1701
        %v1703 = vlaneseq
        %v1704 = vshrl.u32 %v1703, 7
        %v1705 = vsub.s32 %v1702, %v1704
        %v1706 = vrot.slane %v1690, %v1705
        %v1708 = vunpack.c.l.s4 1966171168
        %v1709 = vunpack.c.0.s8 %v1708
        %v1710 = vlaneseq
        %v1711 = vshrl.u32 %v1710, 7
        %v1712 = vsub.s32 %v1709, %v1711
        %v1713 = vrot.slane %v1691, %v1712
        %v1715 = vunpack.c.l.s4 1966171168
        %v1716 = vunpack.c.0.s8 %v1715
        %v1717 = vlaneseq
        %v1718 = vshrl.u32 %v1717, 7
        %v1719 = vsub.s32 %v1716, %v1718
        %v1720 = vrot.slane %v1692, %v1719
        %v1721 = vcombine.high %v1699, %v1699
        %v1722 = vcombine.high %v1706, %v1706
        %v1723 = vcombine.high %v1713, %v1713
        %v1724 = vcombine.high %v1720, %v1720
        %v1725 = vcombine.high %v1469, %v1469
        %v1727 = vunpack.c.l.s4 1966171168
        %v1728 = vunpack.c.0.s8 %v1727
        %v1729 = vlaneseq
        %v1730 = vshrl.u32 %v1729, 7
        %v1731 = vsub.s32 %v1728, %v1730
        %v1732 = vrot.slane %v1469, %v1731
        %v1734 = vunpack.c.l.s4 1966171168
        %v1735 = vunpack.c.0.s8 %v1734
        %v1736 = vlaneseq
        %v1737 = vshrl.u32 %v1736, 7
        %v1738 = vsub.s32 %v1735, %v1737
        %v1739 = vrot.slane %v1725, %v1738
        %v1740 = vcombine.high %v1732, %v1732
        %v1741 = vcombine.high %v1739, %v1739
        %v1743 = vunpack.c.l.s4 1966171168
        %v1744 = vunpack.c.0.s8 %v1743
        %v1745 = vlaneseq
        %v1746 = vshrl.u32 %v1745, 7
        %v1747 = vsub.s32 %v1744, %v1746
        %v1748 = vrot.slane %v1732, %v1747
        %v1750 = vunpack.c.l.s4 1966171168
        %v1751 = vunpack.c.0.s8 %v1750
        %v1752 = vlaneseq
        %v1753 = vshrl.u32 %v1752, 7
        %v1754 = vsub.s32 %v1751, %v1753
        %v1755 = vrot.slane %v1739, %v1754
        %v1757 = vunpack.c.l.s4 1966171168
        %v1758 = vunpack.c.0.s8 %v1757
        %v1759 = vlaneseq
        %v1760 = vshrl.u32 %v1759, 7
        %v1761 = vsub.s32 %v1758, %v1760
        %v1762 = vrot.slane %v1740, %v1761
        %v1764 = vunpack.c.l.s4 1966171168
        %v1765 = vunpack.c.0.s8 %v1764
        %v1766 = vlaneseq
        %v1767 = vshrl.u32 %v1766, 7
        %v1768 = vsub.s32 %v1765, %v1767
        %v1769 = vrot.slane %v1741, %v1768
        %v1770 = vcombine.high %v1748, %v1748
        %v1771 = vcombine.high %v1755, %v1755
        %v1772 = vcombine.high %v1762, %v1762
        %v1773 = vcombine.high %v1769, %v1769
        %v1774 = vcombine.high %v1470, %v1470
        %v1776 = vunpack.c.l.s4 1966171168
        %v1777 = vunpack.c.0.s8 %v1776
        %v1778 = vlaneseq
        %v1779 = vshrl.u32 %v1778, 7
        %v1780 = vsub.s32 %v1777, %v1779
        %v1781 = vrot.slane %v1470, %v1780
        %v1783 = vunpack.c.l.s4 1966171168
        %v1784 = vunpack.c.0.s8 %v1783
        %v1785 = vlaneseq
        %v1786 = vshrl.u32 %v1785, 7
        %v1787 = vsub.s32 %v1784, %v1786
        %v1788 = vrot.slane %v1774, %v1787
        %v1789 = vcombine.high %v1781, %v1781
        %v1790 = vcombine.high %v1788, %v1788
        %v1792 = vunpack.c.l.s4 1966171168
        %v1793 = vunpack.c.0.s8 %v1792
        %v1794 = vlaneseq
        %v1795 = vshrl.u32 %v1794, 7
        %v1796 = vsub.s32 %v1793, %v1795
        %v1797 = vrot.slane %v1781, %v1796
        %v1799 = vunpack.c.l.s4 1966171168
        %v1800 = vunpack.c.0.s8 %v1799
        %v1801 = vlaneseq
        %v1802 = vshrl.u32 %v1801, 7
        %v1803 = vsub.s32 %v1800, %v1802
        %v1804 = vrot.slane %v1788, %v1803
        %v1806 = vunpack.c.l.s4 1966171168
        %v1807 = vunpack.c.0.s8 %v1806
        %v1808 = vlaneseq
        %v1809 = vshrl.u32 %v1808, 7
        %v1810 = vsub.s32 %v1807, %v1809
        %v1811 = vrot.slane %v1789, %v1810
        %v1813 = vunpack.c.l.s4 1966171168
        %v1814 = vunpack.c.0.s8 %v1813
        %v1815 = vlaneseq
        %v1816 = vshrl.u32 %v1815, 7
        %v1817 = vsub.s32 %v1814, %v1816
        %v1818 = vrot.slane %v1790, %v1817
        %v1819 = vcombine.high %v1797, %v1797
        %v1820 = vcombine.high %v1804, %v1804
        %v1821 = vcombine.high %v1811, %v1811
        %v1822 = vcombine.high %v1818, %v1818
        %v1823 = vcombine.high %v1471, %v1471
        %v1825 = vunpack.c.l.s4 1966171168
        %v1826 = vunpack.c.0.s8 %v1825
        %v1827 = vlaneseq
        %v1828 = vshrl.u32 %v1827, 7
        %v1829 = vsub.s32 %v1826, %v1828
        %v1830 = vrot.slane %v1471, %v1829
        %v1832 = vunpack.c.l.s4 1966171168
        %v1833 = vunpack.c.0.s8 %v1832
        %v1834 = vlaneseq
        %v1835 = vshrl.u32 %v1834, 7
        %v1836 = vsub.s32 %v1833, %v1835
        %v1837 = vrot.slane %v1823, %v1836
        %v1838 = vcombine.high %v1830, %v1830
        %v1839 = vcombine.high %v1837, %v1837
        %v1841 = vunpack.c.l.s4 1966171168
        %v1842 = vunpack.c.0.s8 %v1841
        %v1843 = vlaneseq
        %v1844 = vshrl.u32 %v1843, 7
        %v1845 = vsub.s32 %v1842, %v1844
        %v1846 = vrot.slane %v1830, %v1845
        %v1848 = vunpack.c.l.s4 1966171168
        %v1849 = vunpack.c.0.s8 %v1848
        %v1850 = vlaneseq
        %v1851 = vshrl.u32 %v1850, 7
        %v1852 = vsub.s32 %v1849, %v1851
        %v1853 = vrot.slane %v1837, %v1852
        %v1855 = vunpack.c.l.s4 1966171168
        %v1856 = vunpack.c.0.s8 %v1855
        %v1857 = vlaneseq
        %v1858 = vshrl.u32 %v1857, 7
        %v1859 = vsub.s32 %v1856, %v1858
        %v1860 = vrot.slane %v1838, %v1859
        %v1862 = vunpack.c.l.s4 1966171168
        %v1863 = vunpack.c.0.s8 %v1862
        %v1864 = vlaneseq
        %v1865 = vshrl.u32 %v1864, 7
        %v1866 = vsub.s32 %v1863, %v1865
        %v1867 = vrot.slane %v1839, %v1866
        %v1868 = vcombine.high %v1846, %v1846
        %v1869 = vcombine.high %v1853, %v1853
        %v1870 = vcombine.high %v1860, %v1860
        %v1871 = vcombine.high %v1867, %v1867
        %v1872 = vlaneseq
        %v1873 = vshrl.u32 %v1872, 7
        %v1874 = vsub.s32 0, %v1873
        %v1875 = vrot.slane %v1503, %v1874
        %v1876 = vlaneseq
        %v1877 = vshrl.u32 %v1876, 7
        %v1878 = vsub.s32 0, %v1877
        %v1879 = vrot.slane %v1517, %v1878
        %v1880 = vlaneseq
        %v1881 = vshrl.u32 %v1880, 7
        %v1882 = vsub.s32 0, %v1881
        %v1883 = vrot.slane %v1525, %v1882
        %v1884 = vlaneseq
        %v1885 = vshrl.u32 %v1884, 7
        %v1886 = vsub.s32 0, %v1885
        %v1887 = vrot.slane %v1527, %v1886
        %v1888 = vlaneseq
        %v1889 = vshrl.u32 %v1888, 7
        %v1890 = vsub.s32 0, %v1889
        %v1891 = vrot.slane %v1510, %v1890
        %v1892 = vlaneseq
        %v1893 = vshrl.u32 %v1892, 7
        %v1894 = vsub.s32 0, %v1893
        %v1895 = vrot.slane %v1524, %v1894
        %v1896 = vlaneseq
        %v1897 = vshrl.u32 %v1896, 7
        %v1898 = vsub.s32 0, %v1897
        %v1899 = vrot.slane %v1526, %v1898
        %v1900 = vlaneseq
        %v1901 = vshrl.u32 %v1900, 7
        %v1902 = vsub.s32 0, %v1901
        %v1903 = vrot.slane %v1528, %v1902
        %v1904 = vlaneseq
        %v1905 = vshrl.u32 %v1904, 7
        %v1906 = vsub.s32 0, %v1905
        %v1907 = vrot.slane %v1552, %v1906
        %v1908 = vlaneseq
        %v1909 = vshrl.u32 %v1908, 7
        %v1910 = vsub.s32 0, %v1909
        %v1911 = vrot.slane %v1566, %v1910
        %v1912 = vlaneseq
        %v1913 = vshrl.u32 %v1912, 7
        %v1914 = vsub.s32 0, %v1913
        %v1915 = vrot.slane %v1574, %v1914
        %v1916 = vlaneseq
        %v1917 = vshrl.u32 %v1916, 7
        %v1918 = vsub.s32 0, %v1917
        %v1919 = vrot.slane %v1576, %v1918
        %v1920 = vlaneseq
        %v1921 = vshrl.u32 %v1920, 7
        %v1922 = vsub.s32 0, %v1921
        %v1923 = vrot.slane %v1559, %v1922
        %v1924 = vlaneseq
        %v1925 = vshrl.u32 %v1924, 7
        %v1926 = vsub.s32 0, %v1925
        %v1927 = vrot.slane %v1573, %v1926
        %v1928 = vlaneseq
        %v1929 = vshrl.u32 %v1928, 7
        %v1930 = vsub.s32 0, %v1929
        %v1931 = vrot.slane %v1575, %v1930
        %v1932 = vlaneseq
        %v1933 = vshrl.u32 %v1932, 7
        %v1934 = vsub.s32 0, %v1933
        %v1935 = vrot.slane %v1577, %v1934
        %v1936 = vlaneseq
        %v1937 = vshrl.u32 %v1936, 7
        %v1938 = vsub.s32 0, %v1937
        %v1939 = vrot.slane %v1601, %v1938
        %v1940 = vlaneseq
        %v1941 = vshrl.u32 %v1940, 7
        %v1942 = vsub.s32 0, %v1941
        %v1943 = vrot.slane %v1615, %v1942
        %v1944 = vlaneseq
        %v1945 = vshrl.u32 %v1944, 7
        %v1946 = vsub.s32 0, %v1945
        %v1947 = vrot.slane %v1623, %v1946
        %v1948 = vlaneseq
        %v1949 = vshrl.u32 %v1948, 7
        %v1950 = vsub.s32 0, %v1949
        %v1951 = vrot.slane %v1625, %v1950
        %v1952 = vlaneseq
        %v1953 = vshrl.u32 %v1952, 7
        %v1954 = vsub.s32 0, %v1953
        %v1955 = vrot.slane %v1608, %v1954
        %v1956 = vlaneseq
        %v1957 = vshrl.u32 %v1956, 7
        %v1958 = vsub.s32 0, %v1957
        %v1959 = vrot.slane %v1622, %v1958
        %v1960 = vlaneseq
        %v1961 = vshrl.u32 %v1960, 7
        %v1962 = vsub.s32 0, %v1961
        %v1963 = vrot.slane %v1624, %v1962
        %v1964 = vlaneseq
        %v1965 = vshrl.u32 %v1964, 7
        %v1966 = vsub.s32 0, %v1965
        %v1967 = vrot.slane %v1626, %v1966
        %v1968 = vlaneseq
        %v1969 = vshrl.u32 %v1968, 7
        %v1970 = vsub.s32 0, %v1969
        %v1971 = vrot.slane %v1650, %v1970
        %v1972 = vlaneseq
        %v1973 = vshrl.u32 %v1972, 7
        %v1974 = vsub.s32 0, %v1973
        %v1975 = vrot.slane %v1664, %v1974
        %v1976 = vlaneseq
        %v1977 = vshrl.u32 %v1976, 7
        %v1978 = vsub.s32 0, %v1977
        %v1979 = vrot.slane %v1672, %v1978
        %v1980 = vlaneseq
        %v1981 = vshrl.u32 %v1980, 7
        %v1982 = vsub.s32 0, %v1981
        %v1983 = vrot.slane %v1674, %v1982
        %v1984 = vlaneseq
        %v1985 = vshrl.u32 %v1984, 7
        %v1986 = vsub.s32 0, %v1985
        %v1987 = vrot.slane %v1657, %v1986
        %v1988 = vlaneseq
        %v1989 = vshrl.u32 %v1988, 7
        %v1990 = vsub.s32 0, %v1989
        %v1991 = vrot.slane %v1671, %v1990
        %v1992 = vlaneseq
        %v1993 = vshrl.u32 %v1992, 7
        %v1994 = vsub.s32 0, %v1993
        %v1995 = vrot.slane %v1673, %v1994
        %v1996 = vlaneseq
        %v1997 = vshrl.u32 %v1996, 7
        %v1998 = vsub.s32 0, %v1997
        %v1999 = vrot.slane %v1675, %v1998
        %v2000 = vlaneseq
        %v2001 = vshrl.u32 %v2000, 7
        %v2002 = vsub.s32 0, %v2001
        %v2003 = vrot.slane %v1699, %v2002
        %v2004 = vlaneseq
        %v2005 = vshrl.u32 %v2004, 7
        %v2006 = vsub.s32 0, %v2005
        %v2007 = vrot.slane %v1713, %v2006
        %v2008 = vlaneseq
        %v2009 = vshrl.u32 %v2008, 7
        %v2010 = vsub.s32 0, %v2009
        %v2011 = vrot.slane %v1721, %v2010
        %v2012 = vlaneseq
        %v2013 = vshrl.u32 %v2012, 7
        %v2014 = vsub.s32 0, %v2013
        %v2015 = vrot.slane %v1723, %v2014
        %v2016 = vlaneseq
        %v2017 = vshrl.u32 %v2016, 7
        %v2018 = vsub.s32 0, %v2017
        %v2019 = vrot.slane %v1706, %v2018
        %v2020 = vlaneseq
        %v2021 = vshrl.u32 %v2020, 7
        %v2022 = vsub.s32 0, %v2021
        %v2023 = vrot.slane %v1720, %v2022
        %v2024 = vlaneseq
        %v2025 = vshrl.u32 %v2024, 7
        %v2026 = vsub.s32 0, %v2025
        %v2027 = vrot.slane %v1722, %v2026
        %v2028 = vlaneseq
        %v2029 = vshrl.u32 %v2028, 7
        %v2030 = vsub.s32 0, %v2029
        %v2031 = vrot.slane %v1724, %v2030
        %v2032 = vlaneseq
        %v2033 = vshrl.u32 %v2032, 7
        %v2034 = vsub.s32 0, %v2033
        %v2035 = vrot.slane %v1748, %v2034
        %v2036 = vlaneseq
        %v2037 = vshrl.u32 %v2036, 7
        %v2038 = vsub.s32 0, %v2037
        %v2039 = vrot.slane %v1762, %v2038
        %v2040 = vlaneseq
        %v2041 = vshrl.u32 %v2040, 7
        %v2042 = vsub.s32 0, %v2041
        %v2043 = vrot.slane %v1770, %v2042
        %v2044 = vlaneseq
        %v2045 = vshrl.u32 %v2044, 7
        %v2046 = vsub.s32 0, %v2045
        %v2047 = vrot.slane %v1772, %v2046
        %v2048 = vlaneseq
        %v2049 = vshrl.u32 %v2048, 7
        %v2050 = vsub.s32 0, %v2049
        %v2051 = vrot.slane %v1755, %v2050
        %v2052 = vlaneseq
        %v2053 = vshrl.u32 %v2052, 7
        %v2054 = vsub.s32 0, %v2053
        %v2055 = vrot.slane %v1769, %v2054
        %v2056 = vlaneseq
        %v2057 = vshrl.u32 %v2056, 7
        %v2058 = vsub.s32 0, %v2057
        %v2059 = vrot.slane %v1771, %v2058
        %v2060 = vlaneseq
        %v2061 = vshrl.u32 %v2060, 7
        %v2062 = vsub.s32 0, %v2061
        %v2063 = vrot.slane %v1773, %v2062
        %v2064 = vlaneseq
        %v2065 = vshrl.u32 %v2064, 7
        %v2066 = vsub.s32 0, %v2065
        %v2067 = vrot.slane %v1797, %v2066
        %v2068 = vlaneseq
        %v2069 = vshrl.u32 %v2068, 7
        %v2070 = vsub.s32 0, %v2069
        %v2071 = vrot.slane %v1811, %v2070
        %v2072 = vlaneseq
        %v2073 = vshrl.u32 %v2072, 7
        %v2074 = vsub.s32 0, %v2073
        %v2075 = vrot.slane %v1819, %v2074
        %v2076 = vlaneseq
        %v2077 = vshrl.u32 %v2076, 7
        %v2078 = vsub.s32 0, %v2077
        %v2079 = vrot.slane %v1821, %v2078
        %v2080 = vlaneseq
        %v2081 = vshrl.u32 %v2080, 7
        %v2082 = vsub.s32 0, %v2081
        %v2083 = vrot.slane %v1804, %v2082
        %v2084 = vlaneseq
        %v2085 = vshrl.u32 %v2084, 7
        %v2086 = vsub.s32 0, %v2085
        %v2087 = vrot.slane %v1818, %v2086
        %v2088 = vlaneseq
        %v2089 = vshrl.u32 %v2088, 7
        %v2090 = vsub.s32 0, %v2089
        %v2091 = vrot.slane %v1820, %v2090
        %v2092 = vlaneseq
        %v2093 = vshrl.u32 %v2092, 7
        %v2094 = vsub.s32 0, %v2093
        %v2095 = vrot.slane %v1822, %v2094
        %v2096 = vlaneseq
        %v2097 = vshrl.u32 %v2096, 7
        %v2098 = vsub.s32 0, %v2097
        %v2099 = vrot.slane %v1846, %v2098
        %v2100 = vlaneseq
        %v2101 = vshrl.u32 %v2100, 7
        %v2102 = vsub.s32 0, %v2101
        %v2103 = vrot.slane %v1860, %v2102
        %v2104 = vlaneseq
        %v2105 = vshrl.u32 %v2104, 7
        %v2106 = vsub.s32 0, %v2105
        %v2107 = vrot.slane %v1868, %v2106
        %v2108 = vlaneseq
        %v2109 = vshrl.u32 %v2108, 7
        %v2110 = vsub.s32 0, %v2109
        %v2111 = vrot.slane %v1870, %v2110
        %v2112 = vlaneseq
        %v2113 = vshrl.u32 %v2112, 7
        %v2114 = vsub.s32 0, %v2113
        %v2115 = vrot.slane %v1853, %v2114
        %v2116 = vlaneseq
        %v2117 = vshrl.u32 %v2116, 7
        %v2118 = vsub.s32 0, %v2117
        %v2119 = vrot.slane %v1867, %v2118
        %v2120 = vlaneseq
        %v2121 = vshrl.u32 %v2120, 7
        %v2122 = vsub.s32 0, %v2121
        %v2123 = vrot.slane %v1869, %v2122
        %v2124 = vlaneseq
        %v2125 = vshrl.u32 %v2124, 7
        %v2126 = vsub.s32 0, %v2125
        %v2127 = vrot.slane %v1871, %v2126
        %v2196 = vcombine.high %v875, %v875
        %v2197 = vcombine.high %v880, %v880
        %v2198 = vcombine.high %v885, %v885
        %v2199 = vcombine.high %v890, %v890
        %v2204 = vmul.f32 %v1875, %v875
        %v2205 = vmul.f32 %v1879, %v2196
        %v2206 = vmul.f32 %v1883, %v880
        %v2207 = vmul.f32 %v1887, %v2197
        %v2208 = vmul.f32 %v1891, %v885
        %v2209 = vmul.f32 %v1895, %v2198
        %v2210 = vmul.f32 %v1899, %v890
        %v2211 = vmul.f32 %v1903, %v2199
        %v2212 = vmul.f32 %v1907, %v875
        %v2213 = vmul.f32 %v1911, %v2196
        %v2214 = vmul.f32 %v1915, %v880
        %v2215 = vmul.f32 %v1919, %v2197
        %v2216 = vmul.f32 %v1923, %v885
        %v2217 = vmul.f32 %v1927, %v2198
        %v2218 = vmul.f32 %v1931, %v890
        %v2219 = vmul.f32 %v1935, %v2199
        %v2220 = vmul.f32 %v1939, %v875
        %v2221 = vmul.f32 %v1943, %v2196
        %v2222 = vmul.f32 %v1947, %v880
        %v2223 = vmul.f32 %v1951, %v2197
        %v2224 = vmul.f32 %v1955, %v885
        %v2225 = vmul.f32 %v1959, %v2198
        %v2226 = vmul.f32 %v1963, %v890
        %v2227 = vmul.f32 %v1967, %v2199
        %v2228 = vmul.f32 %v1971, %v875
        %v2229 = vmul.f32 %v1975, %v2196
        %v2230 = vmul.f32 %v1979, %v880
        %v2231 = vmul.f32 %v1983, %v2197
        %v2232 = vmul.f32 %v1987, %v885
        %v2233 = vmul.f32 %v1991, %v2198
        %v2234 = vmul.f32 %v1995, %v890
        %v2235 = vmul.f32 %v1999, %v2199
        %v2236 = vmul.f32 %v2003, %v875
        %v2237 = vmul.f32 %v2007, %v2196
        %v2238 = vmul.f32 %v2011, %v880
        %v2239 = vmul.f32 %v2015, %v2197
        %v2240 = vmul.f32 %v2019, %v885
        %v2241 = vmul.f32 %v2023, %v2198
        %v2242 = vmul.f32 %v2027, %v890
        %v2243 = vmul.f32 %v2031, %v2199
        %v2244 = vmul.f32 %v2035, %v875
        %v2245 = vmul.f32 %v2039, %v2196
        %v2246 = vmul.f32 %v2043, %v880
        %v2247 = vmul.f32 %v2047, %v2197
        %v2248 = vmul.f32 %v2051, %v885
        %v2249 = vmul.f32 %v2055, %v2198
        %v2250 = vmul.f32 %v2059, %v890
        %v2251 = vmul.f32 %v2063, %v2199
        %v2252 = vmul.f32 %v2067, %v875
        %v2253 = vmul.f32 %v2071, %v2196
        %v2254 = vmul.f32 %v2075, %v880
        %v2255 = vmul.f32 %v2079, %v2197
        %v2256 = vmul.f32 %v2083, %v885
        %v2257 = vmul.f32 %v2087, %v2198
        %v2258 = vmul.f32 %v2091, %v890
        %v2259 = vmul.f32 %v2095, %v2199
        %v2260 = vmul.f32 %v2099, %v875
        %v2261 = vmul.f32 %v2103, %v2196
        %v2262 = vmul.f32 %v2107, %v880
        %v2263 = vmul.f32 %v2111, %v2197
        %v2264 = vmul.f32 %v2115, %v885
        %v2265 = vmul.f32 %v2119, %v2198
        %v2266 = vmul.f32 %v2123, %v890
        %v2267 = vmul.f32 %v2127, %v2199
        %v2268 = vsel %vm461, %v2204, 0.0
        %v2269 = vsel %vm461, %v2205, 0.0
        %v2270 = vadd.f32 %v2268, %v2269
        %v2271 = vsel %vm461, %v2206, 0.0
        %v2272 = vadd.f32 %v2270, %v2271
        %v2273 = vsel %vm461, %v2207, 0.0
        %v2274 = vadd.f32 %v2272, %v2273
        %v2275 = vsel %vm461, %v2208, 0.0
        %v2276 = vadd.f32 %v2274, %v2275
        %v2277 = vsel %vm461, %v2209, 0.0
        %v2278 = vadd.f32 %v2276, %v2277
        %v2279 = vsel %vm461, %v2210, 0.0
        %v2280 = vadd.f32 %v2278, %v2279
        %v2281 = vsel %vm461, %v2211, 0.0
        %v2282 = vadd.f32 %v2280, %v2281
        %v2283 = vsel %vm461, %v2212, 0.0
        %v2284 = vsel %vm461, %v2213, 0.0
        %v2285 = vadd.f32 %v2283, %v2284
        %v2286 = vsel %vm461, %v2214, 0.0
        %v2287 = vadd.f32 %v2285, %v2286
        %v2288 = vsel %vm461, %v2215, 0.0
        %v2289 = vadd.f32 %v2287, %v2288
        %v2290 = vsel %vm461, %v2216, 0.0
        %v2291 = vadd.f32 %v2289, %v2290
        %v2292 = vsel %vm461, %v2217, 0.0
        %v2293 = vadd.f32 %v2291, %v2292
        %v2294 = vsel %vm461, %v2218, 0.0
        %v2295 = vadd.f32 %v2293, %v2294
        %v2296 = vsel %vm461, %v2219, 0.0
        %v2297 = vadd.f32 %v2295, %v2296
        %v2298 = vsel %vm461, %v2220, 0.0
        %v2299 = vsel %vm461, %v2221, 0.0
        %v2300 = vadd.f32 %v2298, %v2299
        %v2301 = vsel %vm461, %v2222, 0.0
        %v2302 = vadd.f32 %v2300, %v2301
        %v2303 = vsel %vm461, %v2223, 0.0
        %v2304 = vadd.f32 %v2302, %v2303
        %v2305 = vsel %vm461, %v2224, 0.0
        %v2306 = vadd.f32 %v2304, %v2305
        %v2307 = vsel %vm461, %v2225, 0.0
        %v2308 = vadd.f32 %v2306, %v2307
        %v2309 = vsel %vm461, %v2226, 0.0
        %v2310 = vadd.f32 %v2308, %v2309
        %v2311 = vsel %vm461, %v2227, 0.0
        %v2312 = vadd.f32 %v2310, %v2311
        %v2313 = vsel %vm461, %v2228, 0.0
        %v2314 = vsel %vm461, %v2229, 0.0
        %v2315 = vadd.f32 %v2313, %v2314
        %v2316 = vsel %vm461, %v2230, 0.0
        %v2317 = vadd.f32 %v2315, %v2316
        %v2318 = vsel %vm461, %v2231, 0.0
        %v2319 = vadd.f32 %v2317, %v2318
        %v2320 = vsel %vm461, %v2232, 0.0
        %v2321 = vadd.f32 %v2319, %v2320
        %v2322 = vsel %vm461, %v2233, 0.0
        %v2323 = vadd.f32 %v2321, %v2322
        %v2324 = vsel %vm461, %v2234, 0.0
        %v2325 = vadd.f32 %v2323, %v2324
        %v2326 = vsel %vm461, %v2235, 0.0
        %v2327 = vadd.f32 %v2325, %v2326
        %v2328 = vsel %vm461, %v2236, 0.0
        %v2329 = vsel %vm461, %v2237, 0.0
        %v2330 = vadd.f32 %v2328, %v2329
        %v2331 = vsel %vm461, %v2238, 0.0
        %v2332 = vadd.f32 %v2330, %v2331
        %v2333 = vsel %vm461, %v2239, 0.0
        %v2334 = vadd.f32 %v2332, %v2333
        %v2335 = vsel %vm461, %v2240, 0.0
        %v2336 = vadd.f32 %v2334, %v2335
        %v2337 = vsel %vm461, %v2241, 0.0
        %v2338 = vadd.f32 %v2336, %v2337
        %v2339 = vsel %vm461, %v2242, 0.0
        %v2340 = vadd.f32 %v2338, %v2339
        %v2341 = vsel %vm461, %v2243, 0.0
        %v2342 = vadd.f32 %v2340, %v2341
        %v2343 = vsel %vm461, %v2244, 0.0
        %v2344 = vsel %vm461, %v2245, 0.0
        %v2345 = vadd.f32 %v2343, %v2344
        %v2346 = vsel %vm461, %v2246, 0.0
        %v2347 = vadd.f32 %v2345, %v2346
        %v2348 = vsel %vm461, %v2247, 0.0
        %v2349 = vadd.f32 %v2347, %v2348
        %v2350 = vsel %vm461, %v2248, 0.0
        %v2351 = vadd.f32 %v2349, %v2350
        %v2352 = vsel %vm461, %v2249, 0.0
        %v2353 = vadd.f32 %v2351, %v2352
        %v2354 = vsel %vm461, %v2250, 0.0
        %v2355 = vadd.f32 %v2353, %v2354
        %v2356 = vsel %vm461, %v2251, 0.0
        %v2357 = vadd.f32 %v2355, %v2356
        %v2358 = vsel %vm461, %v2252, 0.0
        %v2359 = vsel %vm461, %v2253, 0.0
        %v2360 = vadd.f32 %v2358, %v2359
        %v2361 = vsel %vm461, %v2254, 0.0
        %v2362 = vadd.f32 %v2360, %v2361
        %v2363 = vsel %vm461, %v2255, 0.0
        %v2364 = vadd.f32 %v2362, %v2363
        %v2365 = vsel %vm461, %v2256, 0.0
        %v2366 = vadd.f32 %v2364, %v2365
        %v2367 = vsel %vm461, %v2257, 0.0
        %v2368 = vadd.f32 %v2366, %v2367
        %v2369 = vsel %vm461, %v2258, 0.0
        %v2370 = vadd.f32 %v2368, %v2369
        %v2371 = vsel %vm461, %v2259, 0.0
        %v2372 = vadd.f32 %v2370, %v2371
        %v2373 = vsel %vm461, %v2260, 0.0
        %v2374 = vsel %vm461, %v2261, 0.0
        %v2375 = vadd.f32 %v2373, %v2374
        %v2376 = vsel %vm461, %v2262, 0.0
        %v2377 = vadd.f32 %v2375, %v2376
        %v2378 = vsel %vm461, %v2263, 0.0
        %v2379 = vadd.f32 %v2377, %v2378
        %v2380 = vsel %vm461, %v2264, 0.0
        %v2381 = vadd.f32 %v2379, %v2380
        %v2382 = vsel %vm461, %v2265, 0.0
        %v2383 = vadd.f32 %v2381, %v2382
        %v2384 = vsel %vm461, %v2266, 0.0
        %v2385 = vadd.f32 %v2383, %v2384
        %v2386 = vsel %vm461, %v2267, 0.0
        %v2387 = vadd.f32 %v2385, %v2386
        %v2388 = vld [vmem:[#allocation8] sm:$0xff]
        %v2389 = vld [vmem:[#allocation8 + $0x8] sm:$0xff]
        %v2390 = vld [vmem:[#allocation8 + $0x10] sm:$0xff]
        %v2391 = vld [vmem:[#allocation8 + $0x18] sm:$0xff]
        %v2392 = vld [vmem:[%s8] sm:$0x1]
        %v2394 = vlaneseq
        %v2395 = vshrl.u32 %v2394, 7
        %v2396 = vsub.s32 0, %v2395
        %v2397 = vrot.slane %v2392, %v2396
        %v2407 = vcombine.low %v2282, %v2297
        %v2408 = vcombine.low %v2312, %v2327
        %v2409 = vcombine.low %v2342, %v2357
        %v2410 = vcombine.low %v2372, %v2387
        %v2411 = vsel %vm630, %v2407, 0
        %v2413 = vsel %vm630, %v2408, 0
        %v2415 = vsel %vm630, %v2409, 0
        %v2417 = vsel %vm630, %v2410, 0
        %2419 = vmatprep.subr.mxu0 0.0
        %2420 = vmatpush1.msra.mxu0 %v2388
        %2421 = vmatprep.subr.mxu0 0.0
        %2422 = vmatpush1.msra.mxu0 %v2389
        %2423 = vmatprep.subr.mxu0 0.0
        %2424 = vmatpush1.msra.mxu0 %v2390
        %2425 = vmatprep.subr.mxu0 0.0
        %2426 = vmatpush1.msra.mxu0 %v2391
        %2427 = vmatprep.subr.mxu0 0.0
        %2428 = vmatpush1.msra.mxu0 0.0
        %2429 = vmatprep.subr.mxu0 0.0
        %2430 = vmatpush1.msra.mxu0 0.0
        %2431 = vmatprep.subr.mxu0 0.0
        %2432 = vmatpush1.msra.mxu0 0.0
        %2433 = vmatprep.subr.mxu0 0.0
        %2434 = vmatpush1.msra.mxu0 0.0
        %2435 = vmatprep.subr.mxu0 0.0
        %2436 = vmatpush1.msra.mxu0 0.0
        %2437 = vmatprep.subr.mxu0 0.0
        %2438 = vmatpush1.msra.mxu0 0.0
        %2439 = vmatprep.subr.mxu0 0.0
        %2440 = vmatpush1.msra.mxu0 0.0
        %2441 = vmatprep.subr.mxu0 0.0
        %2442 = vmatpush1.msra.mxu0 0.0
        %2443 = vmatprep.subr.mxu0 0.0
        %2444 = vmatpush1.msra.mxu0 0.0
        %2445 = vmatprep.subr.mxu0 0.0
        %2446 = vmatpush1.msra.mxu0 0.0
        %2447 = vmatprep.subr.mxu0 0.0
        %2448 = vmatpush1.msra.mxu0 0.0
        %2449 = vmatprep.subr.mxu0 0.0
        %2450 = vmatpush1.msra.mxu0 0.0
        %2451 = vmatprep.subr.mxu0 0.0
        %2452 = vmatpush1.msra.mxu0 0.0
        %2453 = vmatprep.subr.mxu0 0.0
        %2454 = vmatpush1.msra.mxu0 0.0
        %2455 = vmatprep.subr.mxu0 0.0
        %2456 = vmatpush1.msra.mxu0 0.0
        %2457 = vmatprep.subr.mxu0 0.0
        %2458 = vmatpush1.msra.mxu0 0.0
        %2459 = vmatprep.subr.mxu0 0.0
        %2460 = vmatpush1.msra.mxu0 0.0
        %2461 = vmatprep.subr.mxu0 0.0
        %2462 = vmatpush1.msra.mxu0 0.0
        %2463 = vmatprep.subr.mxu0 0.0
        %2464 = vmatpush1.msra.mxu0 0.0
        %2465 = vmatprep.subr.mxu0 0.0
        %2466 = vmatpush1.msra.mxu0 0.0
        %2467 = vmatprep.subr.mxu0 0.0
        %2468 = vmatpush1.msra.mxu0 0.0
        %2469 = vmatprep.subr.mxu0 0.0
        %2470 = vmatpush1.msra.mxu0 0.0
        %2471 = vmatprep.subr.mxu0 0.0
        %2472 = vmatpush1.msra.mxu0 0.0
        %2473 = vmatprep.subr.mxu0 0.0
        %2474 = vmatpush1.msra.mxu0 0.0
        %2475 = vmatprep.subr.mxu0 0.0
        %2476 = vmatpush1.msra.mxu0 0.0
        %2477 = vmatprep.subr.mxu0 0.0
        %2478 = vmatpush1.msra.mxu0 0.0
        %2479 = vmatprep.subr.mxu0 0.0
        %2480 = vmatpush1.msra.mxu0 0.0
        %2481 = vmatprep.subr.mxu0 0.0
        %2482 = vmatpush1.msra.mxu0 0.0
        %2483 = vmatprep.mubr.f32.mxu0 0.0
        %2484 = vmatmul.mubr.f32.gmra.mrb[0].mxu0 %v2411
        %v2485 = vpop.f32.mrb[0].mxu0
        %v2486 = vadd.f32 %v2397, %v2485
        %v2487 = vpop.f32.mrb[0].mxu0
        %2488 = vmatprep.mubr.f32.mxu0 0.0
        %2489 = vmatmul.mubr.f32.gmra.mrb[0].mxu0 %v2413
        %v2490 = vpop.f32.mrb[0].mxu0
        %v2491 = vadd.f32 %v2397, %v2490
        %v2492 = vpop.f32.mrb[0].mxu0
        %2493 = vmatprep.mubr.f32.mxu0 0.0
        %2494 = vmatmul.mubr.f32.gmra.mrb[0].mxu0 %v2415
        %v2495 = vpop.f32.mrb[0].mxu0
        %v2496 = vadd.f32 %v2397, %v2495
        %v2497 = vpop.f32.mrb[0].mxu0
        %2498 = vmatprep.mubr.f32.mxu0 0.0
        %2499 = vmatmul.mubr.f32.gmra.mrb[0].mxu0 %v2417
        %v2500 = vpop.f32.mrb[0].mxu0
        %v2501 = vadd.f32 %v2397, %v2500
        %v2502 = vpop.f32.mrb[0].mxu0
        %2503 = vdwg.mxu0
        %v2508 = vcombine.high %v2486, %v2486
        %v2509 = vcombine.high %v2491, %v2491
        %v2510 = vcombine.high %v2496, %v2496
        %v2511 = vcombine.high %v2501, %v2501
        %v2516 = vadd.f32 %v453, %v2486
        %v2517 = vadd.f32 %v454, %v2508
        %v2518 = vadd.f32 %v455, %v2491
        %v2519 = vadd.f32 %v456, %v2509
        %v2520 = vadd.f32 %v457, %v2496
        %v2521 = vadd.f32 %v458, %v2510
        %v2522 = vadd.f32 %v459, %v2501
        %v2523 = vadd.f32 %v460, %v2511
        %2524 = vst.msk [vmem:[%s448] sm:$0xf] %vm461, %v2516
        %2525 = vst.msk [vmem:[%s448 + $0x4] sm:$0xf] %vm461, %v2517
        %2526 = vst.msk [vmem:[%s448 + $0x8] sm:$0xf] %vm461, %v2518
        %2527 = vst.msk [vmem:[%s448 + $0xc] sm:$0xf] %vm461, %v2519
        %2528 = vst.msk [vmem:[%s448 + $0x10] sm:$0xf] %vm461, %v2520
        %2529 = vst.msk [vmem:[%s448 + $0x14] sm:$0xf] %vm461, %v2521
        %2530 = vst.msk [vmem:[%s448 + $0x18] sm:$0xf] %vm461, %v2522
        %2531 = vst.msk [vmem:[%s448 + $0x1c] sm:$0xf] %vm461, %v2523
        %s2532 = sand.u32 %s257, 1
        %s2533 = scalar_lea.sflag [#allocation4], %s2532
        %s2534 = sand.u32 %s257, 1
        %s2535 = smul.addr %s2534, 32
        %s2536 = scalar_lea.vmem [#allocation11], %s2535
        // Predicated region
        $region81: #{tpu_custom_call.1} parent=59 // pred_check
          %p2537 = pneg %p267
        $region82: #{tpu_custom_call.1} parent=59 // pred_check_branch
          %2539 = sbr.rel (%p2537) target = $region84
        $region83: #{tpu_custom_call.1} parent=59 // pred_region
          %s2541 = ssub.s32 512, 512
          %2542 = vsyncadd %s2533, %s2541
          %s2543 = smul.addr %s29, 8
          %s2544 = smul.addr %s2543, 64
          %s2545 = scalar_lea.hbm %s10, %s2544
          %s2546 = sshll.u32 %s2536, 4
          %s2547 = int_to_ptr.vmem [resolvable:$true] %s2546
          %2552 = dma.vmem_to_hbm [thread:$0]  %s2547, 512, %s2545, %s2533, 64, 64, 4
        $region84: #{tpu_custom_call.1} parent=59 // pred_fallthru
          _
      $region60: #{tpu_custom_call.1} parent=5 // pred_fallthru
        _
      %p2553 = scmp.le.s32.totalorder 2, %s24
      // Predicated region
      $region85: #{tpu_custom_call.1} parent=5 // pred_check
        %p2554 = pneg %p2553
      $region86: #{tpu_custom_call.1} parent=5 // pred_check_branch
        %2556 = sbr.rel (%p2554) target = $region88
      $region87: #{tpu_custom_call.1} parent=5 // pred_region
        %s2557 = ssub.s32 %s24, 2
        // Predicated region
        $region89: #{tpu_custom_call.1} parent=87 // pred_check
          %p2558 = pneg %p273
        $region90: #{tpu_custom_call.1} parent=87 // pred_check_branch
          %2560 = sbr.rel (%p2558) target = $region92
        $region91: #{tpu_custom_call.1} parent=87 // pred_region
          %s2561 = sand.u32 %s258, 1
          %s2562 = scalar_lea.sflag [#allocation4], %s2561
          %s2563 = sand.u32 %s258, 1
          %s2564 = smul.addr %s2563, 32
          %s2565 = scalar_lea.vmem [#allocation11], %s2564
          %2566 = dma.done %s2562, 512
        $region92: #{tpu_custom_call.1} parent=87 // pred_fallthru
          _
      $region88: #{tpu_custom_call.1} parent=5 // pred_fallthru
        _
    $region6: #{tpu_custom_call.1} parent=1 // loop_footer
      %s28 = sadd.s32 1, %s24
    $region7: #{tpu_custom_call.1} parent=1 // loop_footer_branch
      %23 = sbr.rel target = $region3
    $region8: #{tpu_custom_call.1} parent=1 // loop_exit
      _
    %2567 = vsyncpa [#allocation3], 1
    %s2568 = scalar_lea.sflag [#allocation3], 1
    %2569 = vsyncpa %s2568, 1
    %2570 = vsyncpa [#allocation6], 1
    %2571 = vsyncpa [#allocation9], 1
    %2572 = vsyncpa [#allocation4], 1
    %s2573 = scalar_lea.sflag [#allocation4], 1
    %2574 = vsyncpa %s2573, 1

</llo_original>
